<compile_context>
chip_gen: v5e
topology: v5e:2x2
jax: 0.10.0
libtpu: 0.0.40
codegen_flags: <defaults>
</compile_context>

<pallas_src>
import functools

import numpy as np

import jax
import jax.numpy as jnp
from jax.experimental import pallas as pl
from jax.experimental.pallas import tpu as pltpu

_SQRT_HALF = 0.7071067811865476
_LN_EPS = 1e-5


def _round_up(x: int, m: int) -> int:
    return (x + m - 1) // m * m


def _decoder_kernel(x_ref, w1_ref, b1_ref, gamma_ref, beta_ref, w2_ref, b2_ref,
                    o_ref, hn_ref, *, matmul_dtype, f32_precision):
    """One (TM x TN) output tile of linear1 -> GELU -> LayerNorm -> linear2."""
    j = pl.program_id(1)

    # Stage 1 depends only on the row tile: compute once per row tile (the
    # vocab axis is the innermost, sequential grid axis) and cache it in
    # matmul_dtype so the second matmul reads it with no per-tile cast.
    @pl.when(j == 0)
    def _first_stage():
        x = x_ref[...].astype(matmul_dtype)  # no-op when dtypes already match
        # linear1 on the MXU, f32 accumulation.
        h = jnp.dot(x, w1_ref[...], preferred_element_type=jnp.float32,
                    precision=f32_precision)
        h = h + b1_ref[...]
        # Exact (erf-based) GELU, matching PyTorch nn.GELU default, in f32.
        h = 0.5 * h * (1.0 + jax.lax.erf(h * jnp.float32(_SQRT_HALF)))
        # LayerNorm over the feature dim (eps = 1e-5, PyTorch default), in f32.
        mean = jnp.mean(h, axis=-1, keepdims=True)
        cen = h - mean
        var = jnp.mean(cen * cen, axis=-1, keepdims=True)
        hn = cen * jax.lax.rsqrt(var + jnp.float32(_LN_EPS))
        hn = hn * gamma_ref[...] + beta_ref[...]
        hn_ref[...] = hn.astype(hn_ref.dtype)  # cached in matmul_dtype

    # Stage 2: (TM, E) @ (E, TN) against the resident normalized activations.
    out = jnp.dot(hn_ref[...], w2_ref[...], preferred_element_type=jnp.float32,
                  precision=f32_precision)
    out = out + b2_ref[...]
    o_ref[...] = out.astype(o_ref.dtype)


def decoder_forward(src, params, *, tm=None, tn=None,
                    matmul_dtype=jnp.bfloat16, out_dtype=None):
    """src: (batch, seq, embedding) float32. Returns (batch, seq, num_tokens)."""
    w1, b1, gamma, beta, w2, b2 = params
    B, S, E = src.shape
    T = w2.shape[1]
    N = B * S
    out_dtype = src.dtype if out_dtype is None else out_dtype

    wbytes = np.dtype(jnp.dtype(matmul_dtype)).itemsize
    obytes = np.dtype(jnp.dtype(out_dtype)).itemsize
    xbytes = np.dtype(src.dtype).itemsize

    # ---- generation-aware VMEM budget (v7x: 64 MiB/TC, v5e/v6e: 128 MiB) ----
    try:
        vmem_cap = int(pltpu.get_tpu_info().vmem_capacity_bytes)
    except Exception:
        vmem_cap = 64 << 20  # conservative (v7x-sized) fallback
    vmem_budget = vmem_cap * 4 // 5  # ~52 MiB on v7x, ~102 MiB on v5e/v6e

    # ---- tile sizing: sublane-aligned rows, lane-dense MXU-native vocab ----
    n_pad = _round_up(N, 8)
    t_pad = _round_up(T, 128)
    if tn is None:
        if t_pad >= 512:
            tn = 512
        elif t_pad >= 256:
            tn = 256
        else:
            tn = t_pad
    tn = min(_round_up(tn, 128), t_pad)
    t_pad = _round_up(t_pad, tn)

    # VMEM accounting with single-buffered invariants + double-buffered tiles.
    fixed = (E * E * wbytes           # w1 (single-buffered, resident)
             + 3 * E * 4              # b1 / gamma / beta (single-buffered)
             + 2 * E * tn * wbytes    # w2 column tiles (double-buffered)
             + 2 * tn * 4)            # b2 column tiles (double-buffered)
    per_row = (2 * E * xbytes         # x row tiles (double-buffered)
               + 2 * tn * obytes      # out tiles (double-buffered)
               + E * wbytes)          # hn scratch (matmul_dtype)
    if tm is None:
        avail = max(vmem_budget - fixed, 0)
        tm = max(8, min(1024, (avail // max(per_row, 1)) // 8 * 8))
    tm = max(8, min(_round_up(tm, 8), n_pad))
    n_pad = _round_up(n_pad, tm)
    # TODO(synk): for E large enough that a single-buffered w1 (E*E*wbytes) no
    # longer fits the per-TC VMEM budget (e.g. E >= ~4096 bf16 on v7x), switch
    # stage 1 to a K-tiled grid axis (or a separate pallas_call that writes hn
    # to HBM) instead of keeping w1 fully resident.

    vmem_needed = fixed + tm * per_row + (2 << 20)
    vmem_limit = int(min(max(vmem_needed * 5 // 4, 16 << 20), vmem_cap * 9 // 10))

    # ---- pad / lay out operands -------------------------------------------
    x2d = src.reshape(N, E)
    if n_pad != N:
        x2d = jnp.pad(x2d, ((0, n_pad - N), (0, 0)))
    w2p, b2p = w2, b2
    if t_pad != T:
        w2p = jnp.pad(w2, ((0, 0), (0, t_pad - T)))
        b2p = jnp.pad(b2, (0, t_pad - T))

    # Matmul operands in matmul_dtype (bf16 by default); biases / LayerNorm
    # params and all element-wise math stay f32 (right choice on v5e too).
    w1m = w1.astype(matmul_dtype)
    w2m = w2p.astype(matmul_dtype)
    b1r = b1.reshape(1, E).astype(jnp.float32)
    gr = gamma.reshape(1, E).astype(jnp.float32)
    br = beta.reshape(1, E).astype(jnp.float32)
    b2r = b2p.reshape(1, t_pad).astype(jnp.float32)

    grid = (n_pad // tm, t_pad // tn)

    # Advisory cost estimate so XLA overlaps surrounding ops (e.g. bf16 casts).
    cost = pl.CostEstimate(
        flops=int(2 * N * E * E + 2 * N * E * t_pad),
        transcendentals=int(N * E),
        bytes_accessed=int(N * E * xbytes + E * E * wbytes
                           + grid[0] * E * t_pad * wbytes   # w2 re-streams
                           + N * t_pad * obytes + 4 * E * 4 + t_pad * 4),
    )

    f32_precision = (jax.lax.Precision.HIGHEST
                     if jnp.dtype(matmul_dtype) == jnp.float32 else None)
    kernel = functools.partial(_decoder_kernel, matmul_dtype=matmul_dtype,
                               f32_precision=f32_precision)

    def _run(single_buffer_invariants):
        # Grid-invariant operands: constant index_map; single-buffer them so
        # the dead second pipeline buffer doesn't burn VMEM.
        resident = (dict(pipeline_mode=pl.Buffered(1))
                    if single_buffer_invariants else {})
        in_specs = [
            pl.BlockSpec((tm, E), lambda i, j: (i, 0)),               # x rows
            pl.BlockSpec((E, E), lambda i, j: (0, 0), **resident),    # w1
            pl.BlockSpec((1, E), lambda i, j: (0, 0), **resident),    # b1
            pl.BlockSpec((1, E), lambda i, j: (0, 0), **resident),    # gamma
            pl.BlockSpec((1, E), lambda i, j: (0, 0), **resident),    # beta
            pl.BlockSpec((E, tn), lambda i, j: (0, j)),               # w2 cols
            pl.BlockSpec((1, tn), lambda i, j: (0, j)),               # b2 cols
        ]
        return pl.pallas_call(
            kernel,
            out_shape=jax.ShapeDtypeStruct((n_pad, t_pad), out_dtype),
            grid_spec=pltpu.PrefetchScalarGridSpec(
                num_scalar_prefetch=0,
                grid=grid,
                in_specs=in_specs,
                out_specs=pl.BlockSpec((tm, tn), lambda i, j: (i, j)),
                # Cached LN output in matmul_dtype (half the f32 footprint).
                scratch_shapes=[pltpu.VMEM((tm, E), matmul_dtype)],
            ),
            # Row axis parallel (megacore), vocab axis sequential (reuses the
            # cached hn).  Note: on v7x 2-TC chips with very few row tiles this
            # leaves one core idle; accepted for the decode-like regime.
            compiler_params=pltpu.CompilerParams(
                dimension_semantics=("parallel", "arbitrary"),
                vmem_limit_bytes=vmem_limit,
            ),
            cost_estimate=cost,
        )(x2d, w1m, b1r, gr, br, w2m, b2r)

    try:
        out = _run(True)
    except Exception:
        # Fallback for jax versions without BlockSpec pipeline_mode support;
        # identical math, just keeps the (dead) second buffer on invariants.
        out = _run(False)

    return out[:N, :T].reshape(B, S, T)


def decoder_reference(src, params):
    """Plain-JAX f32 reference with identical math (PyTorch semantics)."""
    w1, b1, gamma, beta, w2, b2 = params
    h = src @ w1 + b1
    h = 0.5 * h * (1.0 + jax.lax.erf(h * _SQRT_HALF))
    mean = jnp.mean(h, axis=-1, keepdims=True)
    var = jnp.mean((h - mean) ** 2, axis=-1, keepdims=True)
    hn = (h - mean) * jax.lax.rsqrt(var + _LN_EPS) * gamma + beta
    return hn @ w2 + b2


def init_params(key, num_tokens, embedding_size):
    k1, k2, k3, k4 = jax.random.split(key, 4)
    # Linear weights stored as (in, out) == transpose of PyTorch's (out, in).
    w1 = jax.random.normal(k1, (embedding_size, embedding_size), jnp.float32) * 0.05
    b1 = jax.random.normal(k2, (embedding_size,), jnp.float32) * 0.05
    gamma = jnp.ones((embedding_size,), jnp.float32)    # LayerNorm weight init
    beta = jnp.zeros((embedding_size,), jnp.float32)    # LayerNorm bias init
    w2 = jax.random.normal(k3, (embedding_size, num_tokens), jnp.float32) * 0.05
    b2 = jax.random.normal(k4, (num_tokens,), jnp.float32) * 0.05
    return (w1, b1, gamma, beta, w2, b2)


if __name__ == "__main__":
    key = jax.random.PRNGKey(0)
    k_x, k_p = jax.random.split(key)

    # Small shapes; num_tokens=200 deliberately exercises vocab padding (->256)
    # and (with tm=8, tn=128) both grid axes and the hn-caching path.
    batch, seq, embedding_size, num_tokens = 2, 8, 32, 200
    src = jax.random.normal(k_x, (batch, seq, embedding_size), jnp.float32)
    params = init_params(k_p, num_tokens, embedding_size)

    ref = decoder_reference(src, params)

    # Strict check: f32 MXU operands at HIGHEST precision, forced 2x2 grid.
    out_f32 = decoder_forward(src, params, tm=8, tn=128, matmul_dtype=jnp.float32)
    jax.block_until_ready(out_f32)
    assert out_f32.shape == (batch, seq, num_tokens)
    assert jnp.allclose(out_f32, ref, atol=1e-4, rtol=1e-4), "f32 kernel mismatch"

    # Fast path: bf16 MXU operands, f32 accumulation + f32 GELU/LayerNorm,
    # auto (generation-aware) tile sizing.
    out_bf16 = decoder_forward(src, params, matmul_dtype=jnp.bfloat16)
    jax.block_until_ready(out_bf16)
    assert out_bf16.shape == (batch, seq, num_tokens)
    assert jnp.allclose(out_bf16, ref, atol=5e-2, rtol=5e-2), "bf16 kernel mismatch"

    # Optional bf16 logits output (halves the N*T HBM writeback).
    out_bf16o = decoder_forward(src, params, tm=8, tn=128,
                                matmul_dtype=jnp.bfloat16, out_dtype=jnp.bfloat16)
    jax.block_until_ready(out_bf16o)
    assert out_bf16o.dtype == jnp.bfloat16
    assert jnp.allclose(out_bf16o.astype(jnp.float32), ref, atol=7e-2, rtol=7e-2), \
        "bf16-output kernel mismatch"

    print("KERNEL_OK")
</pallas_src>

<mosaic_0001>
module attributes {stable_mosaic.version = 11 : i64} {
  func.func @_decoder_kernel(%arg0: i32, %arg1: i32, %arg2: memref<8x32xf32, #tpu.memory_space<vmem>>, %arg3: memref<32x32xf32, #tpu.memory_space<vmem>>, %arg4: memref<1x32xf32, #tpu.memory_space<vmem>>, %arg5: memref<1x32xf32, #tpu.memory_space<vmem>>, %arg6: memref<1x32xf32, #tpu.memory_space<vmem>>, %arg7: memref<32x128xf32, #tpu.memory_space<vmem>>, %arg8: memref<1x128xf32, #tpu.memory_space<vmem>>, %arg9: memref<8x128xf32, #tpu.memory_space<vmem>>, %arg10: memref<8x32xf32, #tpu.memory_space<vmem>>) attributes {dimension_semantics = [#tpu.dimension_semantics<parallel>, #tpu.dimension_semantics<arbitrary>], iteration_bounds = array<i64: 2, 2>, scalar_prefetch = 0 : i64, scratch_operands = 1 : i64, tpu.core_type = #tpu.core_type<tc>, window_params = [{transform_indices = @transform_0, window_bounds = array<i64: 8, 32>}, {pipeline_mode = #tpu.pipeline_mode<synchronous>, transform_indices = @transform_1, window_bounds = array<i64: 32, 32>}, {pipeline_mode = #tpu.pipeline_mode<synchronous>, transform_indices = @transform_2, window_bounds = array<i64: 1, 32>}, {pipeline_mode = #tpu.pipeline_mode<synchronous>, transform_indices = @transform_3, window_bounds = array<i64: 1, 32>}, {pipeline_mode = #tpu.pipeline_mode<synchronous>, transform_indices = @transform_4, window_bounds = array<i64: 1, 32>}, {transform_indices = @transform_5, window_bounds = array<i64: 32, 128>}, {transform_indices = @transform_6, window_bounds = array<i64: 1, 128>}, {transform_indices = @transform_7, window_bounds = array<i64: 8, 128>}]} {
    %c0_i32 = arith.constant 0 : i32
    %0 = arith.cmpi eq, %arg1, %c0_i32 : i32
    %1 = arith.extui %0 : i1 to i32
    %c0_i32_0 = arith.constant 0 : i32
    %2 = arith.cmpi ne, %1, %c0_i32_0 : i32
    scf.if %2 {
      %c0_8 = arith.constant 0 : index
      %c0_9 = arith.constant 0 : index
      %10 = vector.load %arg2[%c0_8, %c0_9] : memref<8x32xf32, #tpu.memory_space<vmem>>, vector<8x32xf32>
      %c0_10 = arith.constant 0 : index
      %c0_11 = arith.constant 0 : index
      %11 = vector.load %arg3[%c0_10, %c0_11] : memref<32x32xf32, #tpu.memory_space<vmem>>, vector<32x32xf32>
      %cst_12 = arith.constant dense<0.000000e+00> : vector<8x32xf32>
      %12 = tpu.matmul %10, %11, %cst_12 {dimension_numbers = #tpu.dot_dimension_numbers<[1], [0], [0], [1], [0, 0, 1, 1], [], []>, precision = #tpu.contract_precision<fp32>} : vector<8x32xf32>, vector<32x32xf32>, vector<8x32xf32> -> vector<8x32xf32>
      %c0_13 = arith.constant 0 : index
      %c0_14 = arith.constant 0 : index
      %13 = vector.load %arg4[%c0_13, %c0_14] : memref<1x32xf32, #tpu.memory_space<vmem>>, vector<1x32xf32>
      %14 = vector.broadcast %13 : vector<1x32xf32> to vector<8x32xf32>
      %15 = arith.addf %12, %14 : vector<8x32xf32>
      %cst_15 = arith.constant 5.000000e-01 : f32
      %16 = vector.broadcast %cst_15 : f32 to vector<8x32xf32>
      %17 = arith.mulf %16, %15 : vector<8x32xf32>
      %cst_16 = arith.constant 0.707106769 : f32
      %18 = vector.broadcast %cst_16 : f32 to vector<8x32xf32>
      %19 = arith.mulf %15, %18 : vector<8x32xf32>
      %20 = math.erf %19 : vector<8x32xf32>
      %cst_17 = arith.constant 1.000000e+00 : f32
      %21 = vector.broadcast %cst_17 : f32 to vector<8x32xf32>
      %22 = arith.addf %21, %20 : vector<8x32xf32>
      %23 = arith.mulf %17, %22 : vector<8x32xf32>
      %cst_18 = arith.constant dense<0.000000e+00> : vector<8xf32>
      %24 = vector.multi_reduction <add>, %23, %cst_18 [1] : vector<8x32xf32> to vector<8xf32>
      %25 = vector.shape_cast %24 : vector<8xf32> to vector<8x1xf32>
      %cst_19 = arith.constant 3.200000e+01 : f32
      %26 = vector.broadcast %cst_19 : f32 to vector<8x1xf32>
      %27 = arith.divf %25, %26 : vector<8x1xf32>
      %28 = vector.broadcast %27 : vector<8x1xf32> to vector<8x32xf32>
      %29 = arith.subf %23, %28 : vector<8x32xf32>
      %30 = arith.mulf %29, %29 : vector<8x32xf32>
      %cst_20 = arith.constant dense<0.000000e+00> : vector<8xf32>
      %31 = vector.multi_reduction <add>, %30, %cst_20 [1] : vector<8x32xf32> to vector<8xf32>
      %32 = vector.shape_cast %31 : vector<8xf32> to vector<8x1xf32>
      %cst_21 = arith.constant 3.200000e+01 : f32
      %33 = vector.broadcast %cst_21 : f32 to vector<8x1xf32>
      %34 = arith.divf %32, %33 : vector<8x1xf32>
      %cst_22 = arith.constant 9.99999974E-6 : f32
      %35 = vector.broadcast %cst_22 : f32 to vector<8x1xf32>
      %36 = arith.addf %34, %35 : vector<8x1xf32>
      %37 = math.rsqrt %36 : vector<8x1xf32>
      %38 = vector.broadcast %37 : vector<8x1xf32> to vector<8x32xf32>
      %39 = arith.mulf %29, %38 : vector<8x32xf32>
      %c0_23 = arith.constant 0 : index
      %c0_24 = arith.constant 0 : index
      %40 = vector.load %arg5[%c0_23, %c0_24] : memref<1x32xf32, #tpu.memory_space<vmem>>, vector<1x32xf32>
      %41 = vector.broadcast %40 : vector<1x32xf32> to vector<8x32xf32>
      %42 = arith.mulf %39, %41 : vector<8x32xf32>
      %c0_25 = arith.constant 0 : index
      %c0_26 = arith.constant 0 : index
      %43 = vector.load %arg6[%c0_25, %c0_26] : memref<1x32xf32, #tpu.memory_space<vmem>>, vector<1x32xf32>
      %44 = vector.broadcast %43 : vector<1x32xf32> to vector<8x32xf32>
      %45 = arith.addf %42, %44 : vector<8x32xf32>
      %c0_27 = arith.constant 0 : index
      %c0_28 = arith.constant 0 : index
      %46 = vector.load %arg10[%c0_27, %c0_28] : memref<8x32xf32, #tpu.memory_space<vmem>>, vector<8x32xf32>
      tpu.vector_store %arg10[%c0_27, %c0_28], %45 {strides = array<i32>} : memref<8x32xf32, #tpu.memory_space<vmem>>, vector<8x32xf32>,
    } else {
    }
    %c0 = arith.constant 0 : index
    %c0_1 = arith.constant 0 : index
    %3 = vector.load %arg10[%c0, %c0_1] : memref<8x32xf32, #tpu.memory_space<vmem>>, vector<8x32xf32>
    %c0_2 = arith.constant 0 : index
    %c0_3 = arith.constant 0 : index
    %4 = vector.load %arg7[%c0_2, %c0_3] : memref<32x128xf32, #tpu.memory_space<vmem>>, vector<32x128xf32>
    %cst = arith.constant dense<0.000000e+00> : vector<8x128xf32>
    %5 = tpu.matmul %3, %4, %cst {dimension_numbers = #tpu.dot_dimension_numbers<[1], [0], [0], [1], [0, 0, 1, 1], [], []>, precision = #tpu.contract_precision<fp32>} : vector<8x32xf32>, vector<32x128xf32>, vector<8x128xf32> -> vector<8x128xf32>
    %c0_4 = arith.constant 0 : index
    %c0_5 = arith.constant 0 : index
    %6 = vector.load %arg8[%c0_4, %c0_5] : memref<1x128xf32, #tpu.memory_space<vmem>>, vector<1x128xf32>
    %7 = vector.broadcast %6 : vector<1x128xf32> to vector<8x128xf32>
    %8 = arith.addf %5, %7 : vector<8x128xf32>
    %c0_6 = arith.constant 0 : index
    %c0_7 = arith.constant 0 : index
    %9 = vector.load %arg9[%c0_6, %c0_7] : memref<8x128xf32, #tpu.memory_space<vmem>>, vector<8x128xf32>
    tpu.vector_store %arg9[%c0_6, %c0_7], %8 {strides = array<i32>} : memref<8x128xf32, #tpu.memory_space<vmem>>, vector<8x128xf32>,
    return
  }
  func.func @transform_0(%arg0: i32, %arg1: i32) -> (i32, i32) {
    %c0_i32 = arith.constant 0 : i32
    %c0_i32_0 = arith.constant 0 : i32
    return %arg0, %c0_i32 : i32, i32
  }
  func.func @transform_1(%arg0: i32, %arg1: i32) -> (i32, i32) {
    %c0_i32 = arith.constant 0 : i32
    %c0_i32_0 = arith.constant 0 : i32
    %c0_i32_1 = arith.constant 0 : i32
    return %c0_i32, %c0_i32_0 : i32, i32
  }
  func.func @transform_2(%arg0: i32, %arg1: i32) -> (i32, i32) {
    %c0_i32 = arith.constant 0 : i32
    %c0_i32_0 = arith.constant 0 : i32
    %c0_i32_1 = arith.constant 0 : i32
    return %c0_i32, %c0_i32_0 : i32, i32
  }
  func.func @transform_3(%arg0: i32, %arg1: i32) -> (i32, i32) {
    %c0_i32 = arith.constant 0 : i32
    %c0_i32_0 = arith.constant 0 : i32
    %c0_i32_1 = arith.constant 0 : i32
    return %c0_i32, %c0_i32_0 : i32, i32
  }
  func.func @transform_4(%arg0: i32, %arg1: i32) -> (i32, i32) {
    %c0_i32 = arith.constant 0 : i32
    %c0_i32_0 = arith.constant 0 : i32
    %c0_i32_1 = arith.constant 0 : i32
    return %c0_i32, %c0_i32_0 : i32, i32
  }
  func.func @transform_5(%arg0: i32, %arg1: i32) -> (i32, i32) {
    %c0_i32 = arith.constant 0 : i32
    %c0_i32_0 = arith.constant 0 : i32
    return %c0_i32, %arg1 : i32, i32
  }
  func.func @transform_6(%arg0: i32, %arg1: i32) -> (i32, i32) {
    %c0_i32 = arith.constant 0 : i32
    %c0_i32_0 = arith.constant 0 : i32
    return %c0_i32, %arg1 : i32, i32
  }
  func.func @transform_7(%arg0: i32, %arg1: i32) -> (i32, i32) {
    %c0_i32 = arith.constant 0 : i32
    return %arg0, %arg1 : i32, i32
  }
}

module attributes {stable_mosaic.version = 11 : i64} {
  func.func @_decoder_kernel(%arg0: i32, %arg1: i32, %arg2: memref<8x32xf32, #tpu.memory_space<vmem>>, %arg3: memref<32x32xf32, #tpu.memory_space<vmem>>, %arg4: memref<1x32xf32, #tpu.memory_space<vmem>>, %arg5: memref<1x32xf32, #tpu.memory_space<vmem>>, %arg6: memref<1x32xf32, #tpu.memory_space<vmem>>, %arg7: memref<32x128xf32, #tpu.memory_space<vmem>>, %arg8: memref<1x128xf32, #tpu.memory_space<vmem>>, %arg9: memref<8x128xf32, #tpu.memory_space<vmem>>, %arg10: memref<8x32xf32, #tpu.memory_space<vmem>>) attributes {dimension_semantics = [#tpu.dimension_semantics<parallel>, #tpu.dimension_semantics<arbitrary>], iteration_bounds = array<i64: 2, 2>, scalar_prefetch = 0 : i64, scratch_operands = 1 : i64, tpu.core_type = #tpu.core_type<tc>, window_params = [{transform_indices = @transform_0, window_bounds = array<i64: 8, 32>}, {pipeline_mode = #tpu.pipeline_mode<synchronous>, transform_indices = @transform_1, window_bounds = array<i64: 32, 32>}, {pipeline_mode = #tpu.pipeline_mode<synchronous>, transform_indices = @transform_2, window_bounds = array<i64: 1, 32>}, {pipeline_mode = #tpu.pipeline_mode<synchronous>, transform_indices = @transform_3, window_bounds = array<i64: 1, 32>}, {pipeline_mode = #tpu.pipeline_mode<synchronous>, transform_indices = @transform_4, window_bounds = array<i64: 1, 32>}, {transform_indices = @transform_5, window_bounds = array<i64: 32, 128>}, {transform_indices = @transform_6, window_bounds = array<i64: 1, 128>}, {transform_indices = @transform_7, window_bounds = array<i64: 8, 128>}]} {
    %c0_i32 = arith.constant 0 : i32
    %0 = arith.cmpi eq, %arg1, %c0_i32 : i32
    %1 = arith.extui %0 : i1 to i32
    %c0_i32_0 = arith.constant 0 : i32
    %2 = arith.cmpi ne, %1, %c0_i32_0 : i32
    scf.if %2 {
      %c0_8 = arith.constant 0 : index
      %c0_9 = arith.constant 0 : index
      %10 = vector.load %arg2[%c0_8, %c0_9] : memref<8x32xf32, #tpu.memory_space<vmem>>, vector<8x32xf32>
      %c0_10 = arith.constant 0 : index
      %c0_11 = arith.constant 0 : index
      %11 = vector.load %arg3[%c0_10, %c0_11] : memref<32x32xf32, #tpu.memory_space<vmem>>, vector<32x32xf32>
      %cst_12 = arith.constant dense<0.000000e+00> : vector<8x32xf32>
      %12 = tpu.matmul %10, %11, %cst_12 {dimension_numbers = #tpu.dot_dimension_numbers<[1], [0], [0], [1], [0, 0, 1, 1], [], []>, precision = #tpu.contract_precision<fp32>} : vector<8x32xf32>, vector<32x32xf32>, vector<8x32xf32> -> vector<8x32xf32>
      %c0_13 = arith.constant 0 : index
      %c0_14 = arith.constant 0 : index
      %13 = vector.load %arg4[%c0_13, %c0_14] : memref<1x32xf32, #tpu.memory_space<vmem>>, vector<1x32xf32>
      %14 = vector.broadcast %13 : vector<1x32xf32> to vector<8x32xf32>
      %15 = arith.addf %12, %14 : vector<8x32xf32>
      %cst_15 = arith.constant 5.000000e-01 : f32
      %16 = vector.broadcast %cst_15 : f32 to vector<8x32xf32>
      %17 = arith.mulf %16, %15 : vector<8x32xf32>
      %cst_16 = arith.constant 0.707106769 : f32
      %18 = vector.broadcast %cst_16 : f32 to vector<8x32xf32>
      %19 = arith.mulf %15, %18 : vector<8x32xf32>
      %20 = math.erf %19 : vector<8x32xf32>
      %cst_17 = arith.constant 1.000000e+00 : f32
      %21 = vector.broadcast %cst_17 : f32 to vector<8x32xf32>
      %22 = arith.addf %21, %20 : vector<8x32xf32>
      %23 = arith.mulf %17, %22 : vector<8x32xf32>
      %cst_18 = arith.constant dense<0.000000e+00> : vector<8xf32>
      %24 = vector.multi_reduction <add>, %23, %cst_18 [1] : vector<8x32xf32> to vector<8xf32>
      %25 = vector.shape_cast %24 : vector<8xf32> to vector<8x1xf32>
      %cst_19 = arith.constant 3.200000e+01 : f32
      %26 = vector.broadcast %cst_19 : f32 to vector<8x1xf32>
      %27 = arith.divf %25, %26 : vector<8x1xf32>
      %28 = vector.broadcast %27 : vector<8x1xf32> to vector<8x32xf32>
      %29 = arith.subf %23, %28 : vector<8x32xf32>
      %30 = arith.mulf %29, %29 : vector<8x32xf32>
      %cst_20 = arith.constant dense<0.000000e+00> : vector<8xf32>
      %31 = vector.multi_reduction <add>, %30, %cst_20 [1] : vector<8x32xf32> to vector<8xf32>
      %32 = vector.shape_cast %31 : vector<8xf32> to vector<8x1xf32>
      %cst_21 = arith.constant 3.200000e+01 : f32
      %33 = vector.broadcast %cst_21 : f32 to vector<8x1xf32>
      %34 = arith.divf %32, %33 : vector<8x1xf32>
      %cst_22 = arith.constant 9.99999974E-6 : f32
      %35 = vector.broadcast %cst_22 : f32 to vector<8x1xf32>
      %36 = arith.addf %34, %35 : vector<8x1xf32>
      %37 = math.rsqrt %36 : vector<8x1xf32>
      %38 = vector.broadcast %37 : vector<8x1xf32> to vector<8x32xf32>
      %39 = arith.mulf %29, %38 : vector<8x32xf32>
      %c0_23 = arith.constant 0 : index
      %c0_24 = arith.constant 0 : index
      %40 = vector.load %arg5[%c0_23, %c0_24] : memref<1x32xf32, #tpu.memory_space<vmem>>, vector<1x32xf32>
      %41 = vector.broadcast %40 : vector<1x32xf32> to vector<8x32xf32>
      %42 = arith.mulf %39, %41 : vector<8x32xf32>
      %c0_25 = arith.constant 0 : index
      %c0_26 = arith.constant 0 : index
      %43 = vector.load %arg6[%c0_25, %c0_26] : memref<1x32xf32, #tpu.memory_space<vmem>>, vector<1x32xf32>
      %44 = vector.broadcast %43 : vector<1x32xf32> to vector<8x32xf32>
      %45 = arith.addf %42, %44 : vector<8x32xf32>
      %c0_27 = arith.constant 0 : index
      %c0_28 = arith.constant 0 : index
      %46 = vector.load %arg10[%c0_27, %c0_28] : memref<8x32xf32, #tpu.memory_space<vmem>>, vector<8x32xf32>
      tpu.vector_store %arg10[%c0_27, %c0_28], %45 {strides = array<i32>} : memref<8x32xf32, #tpu.memory_space<vmem>>, vector<8x32xf32>,
    } else {
    }
    %c0 = arith.constant 0 : index
    %c0_1 = arith.constant 0 : index
    %3 = vector.load %arg10[%c0, %c0_1] : memref<8x32xf32, #tpu.memory_space<vmem>>, vector<8x32xf32>
    %c0_2 = arith.constant 0 : index
    %c0_3 = arith.constant 0 : index
    %4 = vector.load %arg7[%c0_2, %c0_3] : memref<32x128xf32, #tpu.memory_space<vmem>>, vector<32x128xf32>
    %cst = arith.constant dense<0.000000e+00> : vector<8x128xf32>
    %5 = tpu.matmul %3, %4, %cst {dimension_numbers = #tpu.dot_dimension_numbers<[1], [0], [0], [1], [0, 0, 1, 1], [], []>, precision = #tpu.contract_precision<fp32>} : vector<8x32xf32>, vector<32x128xf32>, vector<8x128xf32> -> vector<8x128xf32>
    %c0_4 = arith.constant 0 : index
    %c0_5 = arith.constant 0 : index
    %6 = vector.load %arg8[%c0_4, %c0_5] : memref<1x128xf32, #tpu.memory_space<vmem>>, vector<1x128xf32>
    %7 = vector.broadcast %6 : vector<1x128xf32> to vector<8x128xf32>
    %8 = arith.addf %5, %7 : vector<8x128xf32>
    %c0_6 = arith.constant 0 : index
    %c0_7 = arith.constant 0 : index
    %9 = vector.load %arg9[%c0_6, %c0_7] : memref<8x128xf32, #tpu.memory_space<vmem>>, vector<8x128xf32>
    tpu.vector_store %arg9[%c0_6, %c0_7], %8 {strides = array<i32>} : memref<8x128xf32, #tpu.memory_space<vmem>>, vector<8x128xf32>,
    return
  }
  func.func @transform_0(%arg0: i32, %arg1: i32) -> (i32, i32) {
    %c0_i32 = arith.constant 0 : i32
    %c0_i32_0 = arith.constant 0 : i32
    return %arg0, %c0_i32 : i32, i32
  }
  func.func @transform_1(%arg0: i32, %arg1: i32) -> (i32, i32) {
    %c0_i32 = arith.constant 0 : i32
    %c0_i32_0 = arith.constant 0 : i32
    %c0_i32_1 = arith.constant 0 : i32
    return %c0_i32, %c0_i32_0 : i32, i32
  }
  func.func @transform_2(%arg0: i32, %arg1: i32) -> (i32, i32) {
    %c0_i32 = arith.constant 0 : i32
    %c0_i32_0 = arith.constant 0 : i32
    %c0_i32_1 = arith.constant 0 : i32
    return %c0_i32, %c0_i32_0 : i32, i32
  }
  func.func @transform_3(%arg0: i32, %arg1: i32) -> (i32, i32) {
    %c0_i32 = arith.constant 0 : i32
    %c0_i32_0 = arith.constant 0 : i32
    %c0_i32_1 = arith.constant 0 : i32
    return %c0_i32, %c0_i32_0 : i32, i32
  }
  func.func @transform_4(%arg0: i32, %arg1: i32) -> (i32, i32) {
    %c0_i32 = arith.constant 0 : i32
    %c0_i32_0 = arith.constant 0 : i32
    %c0_i32_1 = arith.constant 0 : i32
    return %c0_i32, %c0_i32_0 : i32, i32
  }
  func.func @transform_5(%arg0: i32, %arg1: i32) -> (i32, i32) {
    %c0_i32 = arith.constant 0 : i32
    %c0_i32_0 = arith.constant 0 : i32
    return %c0_i32, %arg1 : i32, i32
  }
  func.func @transform_6(%arg0: i32, %arg1: i32) -> (i32, i32) {
    %c0_i32 = arith.constant 0 : i32
    %c0_i32_0 = arith.constant 0 : i32
    return %c0_i32, %arg1 : i32, i32
  }
  func.func @transform_7(%arg0: i32, %arg1: i32) -> (i32, i32) {
    %c0_i32 = arith.constant 0 : i32
    return %arg0, %arg1 : i32, i32
  }
}

</mosaic_0001>

<llo_original>
// kernel: tpu_custom_call.1
$region0: #{tpu_custom_call.1}
  #allocation0 [shape = 'u32[]', space=smem, size = 0x4, offset = 0x4, fixed_abs, tag = 'smem constant byte address 0x4 - core index']
  #allocation1 [shape = 'u32[72,128]{1,0:T(1,128)}', space=vmem, size = 0x9000, scoped, tag = 'internal scratch']
  #allocation2 [shape = 'f32[8,32]{1,0:T(8,128)}', space=vmem, size = 0x1000, scoped, tag = 'scratch operand']
  %s0 = inlined_call_operand.hbm [shape: f32[16,32], index: 0, kind: input, shape index: {}]
  %s1 = inlined_call_operand.hbm [shape: f32[32,32], index: 1, kind: input, shape index: {}]
  %s2 = inlined_call_operand.vmem [shape: f32[1,32], index: 2, kind: input, shape index: {}]
  %s3 = inlined_call_operand.hbm [shape: f32[1,32], index: 3, kind: input, shape index: {}]
  %s4 = inlined_call_operand.hbm [shape: f32[1,32], index: 4, kind: input, shape index: {}]
  %s5 = inlined_call_operand.hbm [shape: f32[32,256], index: 5, kind: input, shape index: {}]
  %s6 = inlined_call_operand.vmem [shape: f32[1,256], index: 6, kind: input, shape index: {}]
  %s7 = inlined_call_operand.hbm [shape: f32[16,256], index: 7, kind: output, shape index: {}]
  %s8 = sld [smem:[#allocation0]]
  $region85: #{tpu_custom_call.1} parent=0
    _
  %s10 = ssub.s32 1, %s8
  %s11 = scalar_select 0, %s10, %s8
  $region1: #{tpu_custom_call.1} parent=0
    #allocation3 [shape = 'u8[8192]{0}', space=vmem, size = 0x2000, scoped, tag = 'input window, operand 0']
    #allocation4 [shape = 's32[2]{0}', space=sflag, size = 0x8, scoped, tag = 'scoped memory for tpu_custom_call.1']
    #allocation5 [shape = 's32[2]{0}', space=sflag, size = 0x8, scoped, tag = 'scoped memory for tpu_custom_call.1']
    #allocation6 [shape = 'u8[16384]{0}', space=vmem, size = 0x4000, scoped, tag = 'input window, operand 1, single buffered']
    #allocation7 [shape = 's32[1]{0}', space=sflag, size = 0x4, scoped, tag = 'scoped memory for tpu_custom_call.1']
    #allocation8 [shape = 'u8[512]{0}', space=vmem, size = 0x400, scoped, tag = 'input window, operand 3, single buffered']
    #allocation9 [shape = 'u8[512]{0}', space=vmem, size = 0x400, scoped, tag = 'input window, operand 4, single buffered']
    #allocation10 [shape = 's32[1]{0}', space=sflag, size = 0x4, scoped, tag = 'scoped memory for tpu_custom_call.1']
    #allocation11 [shape = 'u8[32768]{0}', space=vmem, size = 0x8000, scoped, tag = 'input window, operand 5']
    #allocation12 [shape = 'u8[8192]{0}', space=vmem, size = 0x2000, scoped, tag = 'output window, operand 0']
    %12 = vsyncpa [#allocation4], 0
    %s13 = scalar_lea.sflag [#allocation4], 1
    %14 = vsyncpa %s13, 0
    %15 = vsyncpa [#allocation7], 0
    %16 = vsyncpa [#allocation10], 0
    %17 = vsyncpa [#allocation5], 0
    %s18 = scalar_lea.sflag [#allocation5], 1
    %19 = vsyncpa %s18, 0
    loop: start=0, step=1, limit=6
    $region2: #{tpu_custom_call.1} parent=1 // loop_pre_header
      _
    $region3: #{tpu_custom_call.1} parent=1 // loop_header
      %s21 = sphi 0, %s25
      %p22 = scmp.ge.s32.totalorder %s21, 6
      %s28 = sphi 0, %s40
      %s29 = sphi 0, %s36
      %s30 = sphi 0, %s28
      %s31 = sphi 0, %s29
      %s32 = sphi 0, %s30
      %s33 = sphi 0, %s31
      %s43 = sphi 0, %s45
      %s46 = sphi 0, %s43
      %s47 = sphi 0, %s46
      %s63 = sphi 0, %s47
      %s67 = sphi 0, %s67
      %s69 = sphi 0, %s67
      %s70 = sphi 0, %s69
      %s84 = sphi 0, %s70
      %s88 = sphi 0, %s88
      %s90 = sphi 0, %s88
      %s91 = sphi 0, %s90
      %s105 = sphi 0, %s91
      %s109 = sphi 0, %s109
      %s111 = sphi 0, %s109
      %s112 = sphi 0, %s111
      %s126 = sphi 0, %s112
      %s130 = sphi 0, %s130
      %s132 = sphi 0, %s130
      %s133 = sphi 0, %s132
      %s147 = sphi 0, %s133
      %s153 = sphi 0, %s155
      %s156 = sphi 0, %s153
      %s157 = sphi 0, %s156
      %s173 = sphi 0, %s157
      %s179 = sphi 0, %s181
      %s182 = sphi 0, %s179
      %s183 = sphi 0, %s182
      %s199 = sphi 0, %s183
      %s207 = sphi 0, %s209
      %s210 = sphi 0, %s207
      %s211 = sphi 0, %s210
      %s227 = sphi 0, %s211
    $region4: #{tpu_custom_call.1} parent=1 // loop_header_branch
      %24 = sbr.rel (%p22) target = $region8
    $region5: #{tpu_custom_call.1} parent=1 // loop_body
      %s26 = ssub.s32 %s21, 1
      %s27 = ssub.s32 %s21, 2
      %s34 = sadd.s32 1, %s29
      %p35 = scmp.ge.s32.totalorder %s34, 2
      %s36 = scalar_select %p35, 0, %s34
      %s37 = sadd.s32 1, %s28
      %s38 = scalar_select %p35, %s37, %s28
      %p39 = scmp.ge.s32.totalorder %s38, 2
      %s40 = scalar_select %p39, 0, %s38
      %s41 = ssub.s32 %s28, %s40
      %p42 = scmp.eq.s32.totalorder %s41, 0
      %s44 = sadd.s32 %s43, 1
      %s45 = scalar_select %p42, %s43, %s44
      %p48 = pneg %p42
      %p49 = scmp.eq.s32.totalorder %s21, 3
      %p50 = por %p48, %p49
      %p51 = scmp.ne.s32.totalorder %s43, %s46
      %p52 = scmp.eq.s32.totalorder %s21, 0
      %p53 = por %p51, %p52
      %p54 = scmp.ne.s32.totalorder %s43, %s46
      %p55 = scmp.eq.s32.totalorder %s26, 3
      %p56 = por %p54, %p55
      %p57 = scmp.ne.s32.totalorder %s46, %s47
      %p58 = scmp.eq.s32.totalorder %s26, 0
      %p59 = por %p57, %p58
      %p60 = scmp.ne.s32.totalorder %s46, %s47
      %p61 = scmp.eq.s32.totalorder %s27, 3
      %p62 = por %p60, %p61
      %p64 = scmp.ne.s32.totalorder %s47, %s63
      %p65 = scmp.eq.s32.totalorder %s27, 0
      %p66 = por %p64, %p65
      %s68 = sadd.s32 %s67, 1
      %p71 = scmp.eq.s32.totalorder %s21, 3
      %p72 = scmp.ne.s32.totalorder %s67, %s69
      %p73 = scmp.eq.s32.totalorder %s21, 0
      %p74 = por %p72, %p73
      %p75 = scmp.ne.s32.totalorder %s67, %s69
      %p76 = scmp.eq.s32.totalorder %s26, 3
      %p77 = por %p75, %p76
      %p78 = scmp.ne.s32.totalorder %s69, %s70
      %p79 = scmp.eq.s32.totalorder %s26, 0
      %p80 = por %p78, %p79
      %p81 = scmp.ne.s32.totalorder %s69, %s70
      %p82 = scmp.eq.s32.totalorder %s27, 3
      %p83 = por %p81, %p82
      %p85 = scmp.ne.s32.totalorder %s70, %s84
      %p86 = scmp.eq.s32.totalorder %s27, 0
      %p87 = por %p85, %p86
      %s89 = sadd.s32 %s88, 1
      %p92 = scmp.eq.s32.totalorder %s21, 3
      %p93 = scmp.ne.s32.totalorder %s88, %s90
      %p94 = scmp.eq.s32.totalorder %s21, 0
      %p95 = por %p93, %p94
      %p96 = scmp.ne.s32.totalorder %s88, %s90
      %p97 = scmp.eq.s32.totalorder %s26, 3
      %p98 = por %p96, %p97
      %p99 = scmp.ne.s32.totalorder %s90, %s91
      %p100 = scmp.eq.s32.totalorder %s26, 0
      %p101 = por %p99, %p100
      %p102 = scmp.ne.s32.totalorder %s90, %s91
      %p103 = scmp.eq.s32.totalorder %s27, 3
      %p104 = por %p102, %p103
      %p106 = scmp.ne.s32.totalorder %s91, %s105
      %p107 = scmp.eq.s32.totalorder %s27, 0
      %p108 = por %p106, %p107
      %s110 = sadd.s32 %s109, 1
      %p113 = scmp.eq.s32.totalorder %s21, 3
      %p114 = scmp.ne.s32.totalorder %s109, %s111
      %p115 = scmp.eq.s32.totalorder %s21, 0
      %p116 = por %p114, %p115
      %p117 = scmp.ne.s32.totalorder %s109, %s111
      %p118 = scmp.eq.s32.totalorder %s26, 3
      %p119 = por %p117, %p118
      %p120 = scmp.ne.s32.totalorder %s111, %s112
      %p121 = scmp.eq.s32.totalorder %s26, 0
      %p122 = por %p120, %p121
      %p123 = scmp.ne.s32.totalorder %s111, %s112
      %p124 = scmp.eq.s32.totalorder %s27, 3
      %p125 = por %p123, %p124
      %p127 = scmp.ne.s32.totalorder %s112, %s126
      %p128 = scmp.eq.s32.totalorder %s27, 0
      %p129 = por %p127, %p128
      %s131 = sadd.s32 %s130, 1
      %p134 = scmp.eq.s32.totalorder %s21, 3
      %p135 = scmp.ne.s32.totalorder %s130, %s132
      %p136 = scmp.eq.s32.totalorder %s21, 0
      %p137 = por %p135, %p136
      %p138 = scmp.ne.s32.totalorder %s130, %s132
      %p139 = scmp.eq.s32.totalorder %s26, 3
      %p140 = por %p138, %p139
      %p141 = scmp.ne.s32.totalorder %s132, %s133
      %p142 = scmp.eq.s32.totalorder %s26, 0
      %p143 = por %p141, %p142
      %p144 = scmp.ne.s32.totalorder %s132, %s133
      %p145 = scmp.eq.s32.totalorder %s27, 3
      %p146 = por %p144, %p145
      %p148 = scmp.ne.s32.totalorder %s133, %s147
      %p149 = scmp.eq.s32.totalorder %s27, 0
      %p150 = por %p148, %p149
      %s151 = ssub.s32 %s29, %s36
      %p152 = scmp.eq.s32.totalorder %s151, 0
      %s154 = sadd.s32 %s153, 1
      %s155 = scalar_select %p152, %s153, %s154
      %p158 = pneg %p152
      %p159 = scmp.eq.s32.totalorder %s21, 3
      %p160 = por %p158, %p159
      %p161 = scmp.ne.s32.totalorder %s153, %s156
      %p162 = scmp.eq.s32.totalorder %s21, 0
      %p163 = por %p161, %p162
      %p164 = scmp.ne.s32.totalorder %s153, %s156
      %p165 = scmp.eq.s32.totalorder %s26, 3
      %p166 = por %p164, %p165
      %p167 = scmp.ne.s32.totalorder %s156, %s157
      %p168 = scmp.eq.s32.totalorder %s26, 0
      %p169 = por %p167, %p168
      %p170 = scmp.ne.s32.totalorder %s156, %s157
      %p171 = scmp.eq.s32.totalorder %s27, 3
      %p172 = por %p170, %p171
      %p174 = scmp.ne.s32.totalorder %s157, %s173
      %p175 = scmp.eq.s32.totalorder %s27, 0
      %p176 = por %p174, %p175
      %s177 = ssub.s32 %s29, %s36
      %p178 = scmp.eq.s32.totalorder %s177, 0
      %s180 = sadd.s32 %s179, 1
      %s181 = scalar_select %p178, %s179, %s180
      %p184 = pneg %p178
      %p185 = scmp.eq.s32.totalorder %s21, 3
      %p186 = por %p184, %p185
      %p187 = scmp.ne.s32.totalorder %s179, %s182
      %p188 = scmp.eq.s32.totalorder %s21, 0
      %p189 = por %p187, %p188
      %p190 = scmp.ne.s32.totalorder %s179, %s182
      %p191 = scmp.eq.s32.totalorder %s26, 3
      %p192 = por %p190, %p191
      %p193 = scmp.ne.s32.totalorder %s182, %s183
      %p194 = scmp.eq.s32.totalorder %s26, 0
      %p195 = por %p193, %p194
      %p196 = scmp.ne.s32.totalorder %s182, %s183
      %p197 = scmp.eq.s32.totalorder %s27, 3
      %p198 = por %p196, %p197
      %p200 = scmp.ne.s32.totalorder %s183, %s199
      %p201 = scmp.eq.s32.totalorder %s27, 0
      %p202 = por %p200, %p201
      %s203 = ssub.s32 %s28, %s40
      %s204 = ssub.s32 %s29, %s36
      %s205 = sor.u32 %s203, %s204
      %p206 = scmp.eq.s32.totalorder %s205, 0
      %s208 = sadd.s32 %s207, 1
      %s209 = scalar_select %p206, %s207, %s208
      %p212 = pneg %p206
      %p213 = scmp.eq.s32.totalorder %s21, 3
      %p214 = por %p212, %p213
      %p215 = scmp.ne.s32.totalorder %s207, %s210
      %p216 = scmp.eq.s32.totalorder %s21, 0
      %p217 = por %p215, %p216
      %p218 = scmp.ne.s32.totalorder %s207, %s210
      %p219 = scmp.eq.s32.totalorder %s26, 3
      %p220 = por %p218, %p219
      %p221 = scmp.ne.s32.totalorder %s210, %s211
      %p222 = scmp.eq.s32.totalorder %s26, 0
      %p223 = por %p221, %p222
      %p224 = scmp.ne.s32.totalorder %s210, %s211
      %p225 = scmp.eq.s32.totalorder %s27, 3
      %p226 = por %p224, %p225
      %p228 = scmp.ne.s32.totalorder %s211, %s227
      %p229 = scmp.eq.s32.totalorder %s27, 0
      %p230 = por %p228, %p229
      %p231 = scmp.le.s32.totalorder 1, %s21
      %p232 = scmp.lt.s32.totalorder %s21, 5
      %p233 = pnand %p231, %p232
      %p234 = pneg %p233
      // Predicated region
      $region9: #{tpu_custom_call.1} parent=5 // pred_check
        _
      $region10: #{tpu_custom_call.1} parent=5 // pred_check_branch
        %236 = sbr.rel (%p233) target = $region12
      $region11: #{tpu_custom_call.1} parent=5 // pred_region
        %s237 = ssub.s32 %s21, 1
        // Predicated region
        $region13: #{tpu_custom_call.1} parent=11 // pred_check
          %p238 = pneg %p80
        $region14: #{tpu_custom_call.1} parent=11 // pred_check_branch
          %240 = sbr.rel (%p238) target = $region16
        $region15: #{tpu_custom_call.1} parent=11 // pred_region
          %242 = vsyncadd [#allocation7], 0
          %s243 = sshll.u32 %s1, 4
          %s244 = int_to_ptr.hbm [resolvable:$true] %s243
          %s245 = sshll.u32 [#allocation6], 4
          %s246 = int_to_ptr.vmem [resolvable:$true] %s245
          %251 = dma.hbm_to_vmem [thread:$0]  %s244, 512, %s246, [#allocation7], 128, 128, 8
        $region16: #{tpu_custom_call.1} parent=11 // pred_fallthru
          _
        // Predicated region
        $region17: #{tpu_custom_call.1} parent=11 // pred_check
          %p252 = pneg %p101
        $region18: #{tpu_custom_call.1} parent=11 // pred_check_branch
          %254 = sbr.rel (%p252) target = $region20
        $region19: #{tpu_custom_call.1} parent=11 // pred_region
          _
        $region20: #{tpu_custom_call.1} parent=11 // pred_fallthru
          _
        // Predicated region
        $region21: #{tpu_custom_call.1} parent=11 // pred_check
          %p255 = pneg %p122
        $region22: #{tpu_custom_call.1} parent=11 // pred_check_branch
          %257 = sbr.rel (%p255) target = $region24
        $region23: #{tpu_custom_call.1} parent=11 // pred_region
          %259 = vsyncadd [#allocation7], 0
          %s261 = sshll.u32 %s3, 4
          %s262 = int_to_ptr.hbm [resolvable:$true] %s261
          %s263 = sshll.u32 [#allocation8], 4
          %s264 = int_to_ptr.vmem [resolvable:$true] %s263
          %266 = dma.hbm_to_vmem [thread:$0]  %s262, 16, %s264, [#allocation7]
        $region24: #{tpu_custom_call.1} parent=11 // pred_fallthru
          _
        // Predicated region
        $region25: #{tpu_custom_call.1} parent=11 // pred_check
          %p267 = pneg %p143
        $region26: #{tpu_custom_call.1} parent=11 // pred_check_branch
          %269 = sbr.rel (%p267) target = $region28
        $region27: #{tpu_custom_call.1} parent=11 // pred_region
          %271 = vsyncadd [#allocation10], 0
          %s273 = sshll.u32 %s4, 4
          %s274 = int_to_ptr.hbm [resolvable:$true] %s273
          %s275 = sshll.u32 [#allocation9], 4
          %s276 = int_to_ptr.vmem [resolvable:$true] %s275
          %278 = dma.hbm_to_vmem [thread:$0]  %s274, 16, %s276, [#allocation10]
        $region28: #{tpu_custom_call.1} parent=11 // pred_fallthru
          _
      $region12: #{tpu_custom_call.1} parent=5 // pred_fallthru
        _
      %p279 = scmp.lt.s32.totalorder %s21, 4
      // Predicated region
      $region29: #{tpu_custom_call.1} parent=5 // pred_check
        %p280 = pneg %p279
      $region30: #{tpu_custom_call.1} parent=5 // pred_check_branch
        %282 = sbr.rel (%p280) target = $region32
      $region31: #{tpu_custom_call.1} parent=5 // pred_region
        // Predicated region
        $region33: #{tpu_custom_call.1} parent=31 // pred_check
          %p283 = pneg %p53
        $region34: #{tpu_custom_call.1} parent=31 // pred_check_branch
          %285 = sbr.rel (%p283) target = $region36
        $region35: #{tpu_custom_call.1} parent=31 // pred_region
          %s286 = sand.u32 %s21, 1
          %s287 = scalar_lea.sflag [#allocation4], %s286
          %s288 = sand.u32 %s43, 1
          %s289 = smul.addr %s288, 8
          %s290 = scalar_lea.vmem [#allocation3], %s289
          %292 = vsyncadd %s287, 0
          %s293 = smul.addr %s28, 8
          %s294 = scalar_lea.hbm %s0, %s293
          %s296 = sshll.u32 %s294, 4
          %s297 = int_to_ptr.hbm [resolvable:$true] %s296
          %s298 = sshll.u32 %s290, 4
          %s299 = int_to_ptr.vmem [resolvable:$true] %s298
          %301 = dma.hbm_to_vmem [thread:$0]  %s297, 128, %s299, %s287
        $region36: #{tpu_custom_call.1} parent=31 // pred_fallthru
          _
        // Predicated region
        $region37: #{tpu_custom_call.1} parent=31 // pred_check
          %p302 = pneg %p163
        $region38: #{tpu_custom_call.1} parent=31 // pred_check_branch
          %304 = sbr.rel (%p302) target = $region40
        $region39: #{tpu_custom_call.1} parent=31 // pred_region
          %s305 = sand.u32 %s21, 1
          %s306 = scalar_lea.sflag [#allocation4], %s305
          %s307 = sand.u32 %s153, 1
          %s308 = smul.addr %s307, 32
          %s309 = scalar_lea.vmem [#allocation11], %s308
          %311 = vsyncadd %s306, 0
          %s312 = smul.addr %s29, 8
          %s313 = scalar_lea.hbm %s5, %s312
          %s314 = sshll.u32 %s313, 4
          %s315 = int_to_ptr.hbm [resolvable:$true] %s314
          %s316 = sshll.u32 %s309, 4
          %s317 = int_to_ptr.vmem [resolvable:$true] %s316
          %322 = dma.hbm_to_vmem [thread:$0]  %s315, 512, %s317, %s306, 256, 128, 8
        $region40: #{tpu_custom_call.1} parent=31 // pred_fallthru
          _
        // Predicated region
        $region41: #{tpu_custom_call.1} parent=31 // pred_check
          %p323 = pneg %p189
        $region42: #{tpu_custom_call.1} parent=31 // pred_check_branch
          %325 = sbr.rel (%p323) target = $region44
        $region43: #{tpu_custom_call.1} parent=31 // pred_region
          %p326 = scmp.lt.s32.totalorder %s29, 1
          %s327 = scalar_select %p326, %s29, 1
          %s328 = scalar_lea.vmem %s6, %s327
        $region44: #{tpu_custom_call.1} parent=31 // pred_fallthru
          _
      $region32: #{tpu_custom_call.1} parent=5 // pred_fallthru
        _
      %p329 = scmp.le.s32.totalorder 1, %s21
      %p330 = scmp.lt.s32.totalorder %s21, 5
      %p331 = pnand %p329, %p330
      %p332 = pneg %p331
      // Predicated region
      $region45: #{tpu_custom_call.1} parent=5 // pred_check
        _
      $region46: #{tpu_custom_call.1} parent=5 // pred_check_branch
        %334 = sbr.rel (%p331) target = $region48
      $region47: #{tpu_custom_call.1} parent=5 // pred_region
        %s335 = ssub.s32 %s21, 1
        %s336 = sand.u32 %s26, 1
        %s337 = scalar_lea.sflag [#allocation4], %s336
        %s338 = sand.u32 %s46, 1
        %s339 = smul.addr %s338, 8
        %s340 = scalar_lea.vmem [#allocation3], %s339
        // Predicated region
        $region49: #{tpu_custom_call.1} parent=47 // pred_check
          %p341 = pneg %p59
        $region50: #{tpu_custom_call.1} parent=47 // pred_check_branch
          %343 = sbr.rel (%p341) target = $region52
        $region51: #{tpu_custom_call.1} parent=47 // pred_region
          %345 = dma.done %s337, 128
        $region52: #{tpu_custom_call.1} parent=47 // pred_fallthru
          _
        // Predicated region
        $region53: #{tpu_custom_call.1} parent=47 // pred_check
          %p346 = pneg %p80
        $region54: #{tpu_custom_call.1} parent=47 // pred_check_branch
          %348 = sbr.rel (%p346) target = $region56
        $region55: #{tpu_custom_call.1} parent=47 // pred_region
          %350 = dma.done [#allocation7], 512
        $region56: #{tpu_custom_call.1} parent=47 // pred_fallthru
          _
        // Predicated region
        $region57: #{tpu_custom_call.1} parent=47 // pred_check
          %p351 = pneg %p122
        $region58: #{tpu_custom_call.1} parent=47 // pred_check_branch
          %353 = sbr.rel (%p351) target = $region60
        $region59: #{tpu_custom_call.1} parent=47 // pred_region
          %355 = dma.done [#allocation7], 16
        $region60: #{tpu_custom_call.1} parent=47 // pred_fallthru
          _
        // Predicated region
        $region61: #{tpu_custom_call.1} parent=47 // pred_check
          %p356 = pneg %p143
        $region62: #{tpu_custom_call.1} parent=47 // pred_check_branch
          %358 = sbr.rel (%p356) target = $region64
        $region63: #{tpu_custom_call.1} parent=47 // pred_region
          %360 = dma.done [#allocation10], 16
        $region64: #{tpu_custom_call.1} parent=47 // pred_fallthru
          _
        %s361 = sand.u32 %s26, 1
        %s362 = scalar_lea.sflag [#allocation4], %s361
        %s363 = sand.u32 %s156, 1
        %s364 = smul.addr %s363, 32
        %s365 = scalar_lea.vmem [#allocation11], %s364
        // Predicated region
        $region65: #{tpu_custom_call.1} parent=47 // pred_check
          %p366 = pneg %p169
        $region66: #{tpu_custom_call.1} parent=47 // pred_check_branch
          %368 = sbr.rel (%p366) target = $region68
        $region67: #{tpu_custom_call.1} parent=47 // pred_region
          %370 = dma.done %s362, 512
        $region68: #{tpu_custom_call.1} parent=47 // pred_fallthru
          _
        %s371 = sand.u32 %s26, 1
        %s372 = scalar_lea.sflag [#allocation4], %s371
        %s373 = sand.u32 %s46, 1
        %s374 = smul.addr %s373, 8
        %s375 = scalar_lea.vmem [#allocation3], %s374
        %p376 = pneg %p59
        %p377 = pneg %p56
        %p378 = pneg %p80
        %p379 = pneg %p77
        %p380 = pneg %p101
        %p381 = pneg %p98
        %p382 = pneg %p122
        %p383 = pneg %p119
        %p384 = pneg %p143
        %p385 = pneg %p140
        %s386 = sand.u32 %s26, 1
        %s387 = scalar_lea.sflag [#allocation4], %s386
        %s388 = sand.u32 %s156, 1
        %s389 = smul.addr %s388, 32
        %s390 = scalar_lea.vmem [#allocation11], %s389
        %p391 = pneg %p169
        %p392 = pneg %p166
        %p393 = scmp.lt.s32.totalorder %s31, 1
        %s394 = scalar_select %p393, %s31, 1
        %s395 = scalar_lea.vmem %s6, %s394
        %p396 = pneg %p195
        %p397 = pneg %p192
        %p398 = pneg %p223
        %p399 = pneg %p220
        %s400 = sand.u32 %s210, 1
        %s401 = scalar_lea.sflag [#allocation5], %s400
        %s402 = sand.u32 %s210, 1
        %s403 = smul.addr %s402, 8
        %s404 = scalar_lea.vmem [#allocation12], %s403
        %p405 = scmp.lt.s32.totalorder %s31, 1
        %s406 = scalar_select %p405, %s31, 1
        %s407 = scalar_lea.vmem %s6, %s406
        %p408 = scmp.eq.s32.totalorder %s31, 0
        // Predicated region
        $region69: #{tpu_custom_call.1} parent=47 // pred_check
          %p409 = pneg %p408
        $region70: #{tpu_custom_call.1} parent=47 // pred_check_branch
          %411 = sbr.rel (%p409) target = $region72
        $region71: #{tpu_custom_call.1} parent=47 // pred_region
          %v412 = vld [vmem:[%s340] sm:$0xff]
          %v413 = vld [vmem:[#allocation6] sm:$0xff]
          %v414 = vld [vmem:[#allocation6 + $0x8] sm:$0xff]
          %v415 = vld [vmem:[#allocation6 + $0x10] sm:$0xff]
          %v416 = vld [vmem:[#allocation6 + $0x18] sm:$0xff]
          %v417 = vld [vmem:[%s2] sm:$0x1]
          %v419 = vperm.slane %v417, 0
          %vm421 = vcmask 261120
          %v423 = vsel %vm421, %v412, 0
          %425 = vmatpush.msra.mxu0 0.0
          %426 = vmatpush.msra.mxu0 0.0
          %427 = vmatpush.msra.mxu0 0.0
          %428 = vmatpush.msra.mxu0 0.0
          %429 = vmatpush.msra.mxu0 0.0
          %430 = vmatpush.msra.mxu0 0.0
          %431 = vmatpush.msra.mxu0 0.0
          %432 = vmatpush.msra.mxu0 0.0
          %433 = vmatpush.msra.mxu0 0.0
          %434 = vmatpush.msra.mxu0 0.0
          %435 = vmatpush.msra.mxu0 0.0
          %436 = vmatpush.msra.mxu0 0.0
          %v437 = vand.u32 %v416, 4294901760
          %438 = vmatpush.msra.mxu0 %v437
          %v439 = vand.u32 %v415, 4294901760
          %440 = vmatpush.msra.mxu0 %v439
          %v441 = vand.u32 %v414, 4294901760
          %442 = vmatpush.msra.mxu0 %v441
          %v443 = vand.u32 %v413, 4294901760
          %444 = vmatpush.msra.mxu0 %v443
          %v445 = vand.u32 %v423, 4294901760
          %v446 = vsub.f32 %v423, %v445
          %v447 = vand.u32 %v446, 4294901760
          %v448 = vsub.f32 %v446, %v447
          %v449 = vand.u32 %v448, 4294901760
          %450 = vmatmul.f32.gmra.mxu0 %v449
          %v451 = vpop.f32.mrf.mxu0
          %v452 = vadd.f32 %v419, %v451
          %453 = vdwg.mxu0
          %454 = vmatpush.msra.mxu0 0.0
          %455 = vmatpush.msra.mxu0 0.0
          %456 = vmatpush.msra.mxu0 0.0
          %457 = vmatpush.msra.mxu0 0.0
          %458 = vmatpush.msra.mxu0 0.0
          %459 = vmatpush.msra.mxu0 0.0
          %460 = vmatpush.msra.mxu0 0.0
          %461 = vmatpush.msra.mxu0 0.0
          %462 = vmatpush.msra.mxu0 0.0
          %463 = vmatpush.msra.mxu0 0.0
          %464 = vmatpush.msra.mxu0 0.0
          %465 = vmatpush.msra.mxu0 0.0
          %v466 = vand.u32 %v416, 4294901760
          %v467 = vsub.f32 %v416, %v466
          %v468 = vand.u32 %v467, 4294901760
          %v469 = vsub.f32 %v467, %v468
          %v470 = vand.u32 %v469, 4294901760
          %471 = vmatpush.msra.mxu0 %v470
          %v472 = vand.u32 %v415, 4294901760
          %v473 = vsub.f32 %v415, %v472
          %v474 = vand.u32 %v473, 4294901760
          %v475 = vsub.f32 %v473, %v474
          %v476 = vand.u32 %v475, 4294901760
          %477 = vmatpush.msra.mxu0 %v476
          %v478 = vand.u32 %v414, 4294901760
          %v479 = vsub.f32 %v414, %v478
          %v480 = vand.u32 %v479, 4294901760
          %v481 = vsub.f32 %v479, %v480
          %v482 = vand.u32 %v481, 4294901760
          %483 = vmatpush.msra.mxu0 %v482
          %v484 = vand.u32 %v413, 4294901760
          %v485 = vsub.f32 %v413, %v484
          %v486 = vand.u32 %v485, 4294901760
          %v487 = vsub.f32 %v485, %v486
          %v488 = vand.u32 %v487, 4294901760
          %489 = vmatpush.msra.mxu0 %v488
          %v490 = vand.u32 %v423, 4294901760
          %491 = vmatmul.f32.gmra.mxu0 %v490
          %v492 = vpop.f32.mrf.mxu0
          %v493 = vadd.f32 %v452, %v492
          %494 = vdwg.mxu0
          %495 = vmatpush.msra.mxu0 0.0
          %496 = vmatpush.msra.mxu0 0.0
          %497 = vmatpush.msra.mxu0 0.0
          %498 = vmatpush.msra.mxu0 0.0
          %499 = vmatpush.msra.mxu0 0.0
          %500 = vmatpush.msra.mxu0 0.0
          %501 = vmatpush.msra.mxu0 0.0
          %502 = vmatpush.msra.mxu0 0.0
          %503 = vmatpush.msra.mxu0 0.0
          %504 = vmatpush.msra.mxu0 0.0
          %505 = vmatpush.msra.mxu0 0.0
          %506 = vmatpush.msra.mxu0 0.0
          %v507 = vand.u32 %v416, 4294901760
          %v508 = vsub.f32 %v416, %v507
          %509 = vmatpush.msra.mxu0 %v508
          %v510 = vand.u32 %v415, 4294901760
          %v511 = vsub.f32 %v415, %v510
          %512 = vmatpush.msra.mxu0 %v511
          %v513 = vand.u32 %v414, 4294901760
          %v514 = vsub.f32 %v414, %v513
          %515 = vmatpush.msra.mxu0 %v514
          %v516 = vand.u32 %v413, 4294901760
          %v517 = vsub.f32 %v413, %v516
          %518 = vmatpush.msra.mxu0 %v517
          %v519 = vand.u32 %v423, 4294901760
          %v520 = vsub.f32 %v423, %v519
          %521 = vmatmul.f32.gmra.mxu0 %v520
          %v522 = vpop.f32.mrf.mxu0
          %v523 = vadd.f32 %v493, %v522
          %524 = vdwg.mxu0
          %525 = vmatpush.msra.mxu0 0.0
          %526 = vmatpush.msra.mxu0 0.0
          %527 = vmatpush.msra.mxu0 0.0
          %528 = vmatpush.msra.mxu0 0.0
          %529 = vmatpush.msra.mxu0 0.0
          %530 = vmatpush.msra.mxu0 0.0
          %531 = vmatpush.msra.mxu0 0.0
          %532 = vmatpush.msra.mxu0 0.0
          %533 = vmatpush.msra.mxu0 0.0
          %534 = vmatpush.msra.mxu0 0.0
          %535 = vmatpush.msra.mxu0 0.0
          %536 = vmatpush.msra.mxu0 0.0
          %v537 = vand.u32 %v416, 4294901760
          %538 = vmatpush.msra.mxu0 %v537
          %v539 = vand.u32 %v415, 4294901760
          %540 = vmatpush.msra.mxu0 %v539
          %v541 = vand.u32 %v414, 4294901760
          %542 = vmatpush.msra.mxu0 %v541
          %v543 = vand.u32 %v413, 4294901760
          %544 = vmatpush.msra.mxu0 %v543
          %v545 = vand.u32 %v423, 4294901760
          %v546 = vsub.f32 %v423, %v545
          %v547 = vand.u32 %v546, 4294901760
          %548 = vmatmul.f32.gmra.mxu0 %v547
          %v549 = vpop.f32.mrf.mxu0
          %v550 = vadd.f32 %v523, %v549
          %551 = vdwg.mxu0
          %552 = vmatpush.msra.mxu0 0.0
          %553 = vmatpush.msra.mxu0 0.0
          %554 = vmatpush.msra.mxu0 0.0
          %555 = vmatpush.msra.mxu0 0.0
          %556 = vmatpush.msra.mxu0 0.0
          %557 = vmatpush.msra.mxu0 0.0
          %558 = vmatpush.msra.mxu0 0.0
          %559 = vmatpush.msra.mxu0 0.0
          %560 = vmatpush.msra.mxu0 0.0
          %561 = vmatpush.msra.mxu0 0.0
          %562 = vmatpush.msra.mxu0 0.0
          %563 = vmatpush.msra.mxu0 0.0
          %v564 = vand.u32 %v416, 4294901760
          %v565 = vsub.f32 %v416, %v564
          %v566 = vand.u32 %v565, 4294901760
          %567 = vmatpush.msra.mxu0 %v566
          %v568 = vand.u32 %v415, 4294901760
          %v569 = vsub.f32 %v415, %v568
          %v570 = vand.u32 %v569, 4294901760
          %571 = vmatpush.msra.mxu0 %v570
          %v572 = vand.u32 %v414, 4294901760
          %v573 = vsub.f32 %v414, %v572
          %v574 = vand.u32 %v573, 4294901760
          %575 = vmatpush.msra.mxu0 %v574
          %v576 = vand.u32 %v413, 4294901760
          %v577 = vsub.f32 %v413, %v576
          %v578 = vand.u32 %v577, 4294901760
          %579 = vmatpush.msra.mxu0 %v578
          %v580 = vand.u32 %v423, 4294901760
          %581 = vmatmul.f32.gmra.mxu0 %v580
          %v582 = vpop.f32.mrf.mxu0
          %v583 = vadd.f32 %v550, %v582
          %584 = vdwg.mxu0
          %585 = vmatpush.msra.mxu0 0.0
          %586 = vmatpush.msra.mxu0 0.0
          %587 = vmatpush.msra.mxu0 0.0
          %588 = vmatpush.msra.mxu0 0.0
          %589 = vmatpush.msra.mxu0 0.0
          %590 = vmatpush.msra.mxu0 0.0
          %591 = vmatpush.msra.mxu0 0.0
          %592 = vmatpush.msra.mxu0 0.0
          %593 = vmatpush.msra.mxu0 0.0
          %594 = vmatpush.msra.mxu0 0.0
          %595 = vmatpush.msra.mxu0 0.0
          %596 = vmatpush.msra.mxu0 0.0
          %v597 = vand.u32 %v416, 4294901760
          %598 = vmatpush.msra.mxu0 %v597
          %v599 = vand.u32 %v415, 4294901760
          %600 = vmatpush.msra.mxu0 %v599
          %v601 = vand.u32 %v414, 4294901760
          %602 = vmatpush.msra.mxu0 %v601
          %v603 = vand.u32 %v413, 4294901760
          %604 = vmatpush.msra.mxu0 %v603
          %v605 = vand.u32 %v423, 4294901760
          %606 = vmatmul.f32.gmra.mxu0 %v605
          %v607 = vpop.f32.mrf.mxu0
          %v608 = vadd.f32 %v583, %v607
          %609 = vdwg.mxu0
          %v610 = vmul.f32 %v608, 0.5
          %v611 = vmul.f32 %v608, 0.70710677
          %v612 = vmul.f32 %v611, %v611
          %v613 = vmin.f32 16.0, %v612
          %v614 = vmul.f32 %v613, 2.1237322e-06
          %v615 = vadd.f32 %v614, 0.00028619796
          %v616 = vmul.f32 %v613, %v615
          %v617 = vadd.f32 %v616, 0.0036580483
          %v618 = vmul.f32 %v613, %v617
          %v619 = vadd.f32 %v618, 0.05243302
          %v620 = vmul.f32 %v613, %v619
          %v621 = vadd.f32 %v620, 0.18741608
          %v622 = vmul.f32 %v613, %v621
          %v623 = vadd.f32 %v622, 1.1283791
          %v624 = vmul.f32 %v611, %v623
          %v625 = vmul.f32 %v613, 3.8918573e-05
          %v626 = vadd.f32 %v625, 0.001143296
          %v627 = vmul.f32 %v613, %v626
          %v628 = vadd.f32 %v627, 0.014752088
          %v629 = vmul.f32 %v613, %v628
          %v630 = vadd.f32 %v629, 0.112945676
          %v631 = vmul.f32 %v613, %v630
          %v632 = vadd.f32 %v631, 0.4994258
          %v633 = vmul.f32 %v613, %v632
          %v634 = vadd.f32 %v633, 1.0
          %v635 = vrcp.pop %v634
          %v636 = vmul.f32 %v634, %v635
          %v637 = vsub.f32 1.0, %v636
          %v638 = vmul.f32 %v635, %v637
          %v639 = vadd.f32 %v635, %v638
          %vm640 = vweird.f32 %v634
          %vm641 = vweird.f32 %v635
          %vm642 = vmor %vm640, %vm641
          %v643 = vsel %vm642, %v635, %v639
          %v644 = vand.u32 2147483647, %v634
          %vm645 = vcmp.eq.f32.partialorder %v644, 8.507059e+37
          %v646 = vand.u32 %v634, 2147483648
          %v647 = vor.u32 1.1754944e-38, %v646
          %v648 = vsel %vm645, %v647, %v643
          %v649 = vmul.f32 %v624, %v648
          %v650 = vmin.f32 %v649, 1.0
          %v651 = vmax.f32 %v650, -1.0
          %v652 = vadd.f32 %v651, 1.0
          %v653 = vmul.f32 %v610, %v652
          %v654 = vsel %vm421, %v653, 0.0
          %655 = vadd.xlane.f32.xlu0 %v654
          %v656 = vpop.xlane.xlu0 %655
          %v657 = vrcp.pop 32.0
          %v658 = vmul.f32 32.0, %v657
          %v659 = vsub.f32 1.0, %v658
          %v660 = vmul.f32 %v657, %v659
          %v661 = vadd.f32 %v657, %v660
          %vm662 = vweird.f32 %v657
          %v663 = vsel %vm662, %v657, %v661
          %v664 = vmul.f32 %v656, %v663
          %v665 = vsub.f32 %v653, %v664
          %v666 = vmul.f32 %v665, %v665
          %v667 = vsel %vm421, %v666, 0.0
          %668 = vadd.xlane.f32.xlu0 %v667
          %v669 = vpop.xlane.xlu0 %668
          %v670 = vmul.f32 %v669, %v663
          %v671 = vadd.f32 %v670, 1e-05
          %v672 = vrsqrt.pop %v671
          %v673 = vmul.f32 %v672, %v671
          %v674 = vmul.f32 %v673, %v672
          %v675 = vmul.f32 0.5, %v674
          %v676 = vsub.f32 1.5, %v675
          %v677 = vmul.f32 %v672, %v676
          %vm678 = vweird.f32 %v671
          %vm679 = vweird.f32 %v672
          %vm680 = vmor %vm678, %vm679
          %v681 = vsel %vm680, %v672, %v677
          %v682 = vmul.f32 %v665, %v681
          %v683 = vld [vmem:[#allocation8] sm:$0x1]
          %v685 = vperm.slane %v683, 0
          %v687 = vmul.f32 %v682, %v685
          %v688 = vld [vmem:[#allocation9] sm:$0x1]
          %v690 = vperm.slane %v688, 0
          %v692 = vadd.f32 %v687, %v690
          %693 = vst.msk [vmem:[#allocation2] sm:$0xff] %vm421, %v692
        $region72: #{tpu_custom_call.1} parent=47 // pred_fallthru
          _
        %v694 = vld [vmem:[#allocation2] sm:$0xff]
        %v695 = vld [vmem:[%s365] sm:$0xff]
        %v696 = vld [vmem:[%s365 + $0x8] sm:$0xff]
        %v697 = vld [vmem:[%s365 + $0x10] sm:$0xff]
        %v698 = vld [vmem:[%s365 + $0x18] sm:$0xff]
        %v699 = vld [vmem:[%s407] sm:$0x1]
        %v701 = vperm.slane %v699, 0
        %vm703 = vcmask 261120
        %v705 = vsel %vm703, %v694, 0
        %707 = vmatpush.msra.mxu0 0.0
        %708 = vmatpush.msra.mxu0 0.0
        %709 = vmatpush.msra.mxu0 0.0
        %710 = vmatpush.msra.mxu0 0.0
        %711 = vmatpush.msra.mxu0 0.0
        %712 = vmatpush.msra.mxu0 0.0
        %713 = vmatpush.msra.mxu0 0.0
        %714 = vmatpush.msra.mxu0 0.0
        %715 = vmatpush.msra.mxu0 0.0
        %716 = vmatpush.msra.mxu0 0.0
        %717 = vmatpush.msra.mxu0 0.0
        %718 = vmatpush.msra.mxu0 0.0
        %v719 = vand.u32 %v698, 4294901760
        %720 = vmatpush.msra.mxu0 %v719
        %v721 = vand.u32 %v697, 4294901760
        %722 = vmatpush.msra.mxu0 %v721
        %v723 = vand.u32 %v696, 4294901760
        %724 = vmatpush.msra.mxu0 %v723
        %v725 = vand.u32 %v695, 4294901760
        %726 = vmatpush.msra.mxu0 %v725
        %v727 = vand.u32 %v705, 4294901760
        %v728 = vsub.f32 %v705, %v727
        %v729 = vand.u32 %v728, 4294901760
        %v730 = vsub.f32 %v728, %v729
        %v731 = vand.u32 %v730, 4294901760
        %732 = vmatmul.f32.gmra.mxu0 %v731
        %v733 = vpop.f32.mrf.mxu0
        %v734 = vadd.f32 %v701, %v733
        %735 = vdwg.mxu0
        %736 = vmatpush.msra.mxu0 0.0
        %737 = vmatpush.msra.mxu0 0.0
        %738 = vmatpush.msra.mxu0 0.0
        %739 = vmatpush.msra.mxu0 0.0
        %740 = vmatpush.msra.mxu0 0.0
        %741 = vmatpush.msra.mxu0 0.0
        %742 = vmatpush.msra.mxu0 0.0
        %743 = vmatpush.msra.mxu0 0.0
        %744 = vmatpush.msra.mxu0 0.0
        %745 = vmatpush.msra.mxu0 0.0
        %746 = vmatpush.msra.mxu0 0.0
        %747 = vmatpush.msra.mxu0 0.0
        %v748 = vand.u32 %v698, 4294901760
        %v749 = vsub.f32 %v698, %v748
        %v750 = vand.u32 %v749, 4294901760
        %v751 = vsub.f32 %v749, %v750
        %v752 = vand.u32 %v751, 4294901760
        %753 = vmatpush.msra.mxu0 %v752
        %v754 = vand.u32 %v697, 4294901760
        %v755 = vsub.f32 %v697, %v754
        %v756 = vand.u32 %v755, 4294901760
        %v757 = vsub.f32 %v755, %v756
        %v758 = vand.u32 %v757, 4294901760
        %759 = vmatpush.msra.mxu0 %v758
        %v760 = vand.u32 %v696, 4294901760
        %v761 = vsub.f32 %v696, %v760
        %v762 = vand.u32 %v761, 4294901760
        %v763 = vsub.f32 %v761, %v762
        %v764 = vand.u32 %v763, 4294901760
        %765 = vmatpush.msra.mxu0 %v764
        %v766 = vand.u32 %v695, 4294901760
        %v767 = vsub.f32 %v695, %v766
        %v768 = vand.u32 %v767, 4294901760
        %v769 = vsub.f32 %v767, %v768
        %v770 = vand.u32 %v769, 4294901760
        %771 = vmatpush.msra.mxu0 %v770
        %v772 = vand.u32 %v705, 4294901760
        %773 = vmatmul.f32.gmra.mxu0 %v772
        %v774 = vpop.f32.mrf.mxu0
        %v775 = vadd.f32 %v734, %v774
        %776 = vdwg.mxu0
        %777 = vmatpush.msra.mxu0 0.0
        %778 = vmatpush.msra.mxu0 0.0
        %779 = vmatpush.msra.mxu0 0.0
        %780 = vmatpush.msra.mxu0 0.0
        %781 = vmatpush.msra.mxu0 0.0
        %782 = vmatpush.msra.mxu0 0.0
        %783 = vmatpush.msra.mxu0 0.0
        %784 = vmatpush.msra.mxu0 0.0
        %785 = vmatpush.msra.mxu0 0.0
        %786 = vmatpush.msra.mxu0 0.0
        %787 = vmatpush.msra.mxu0 0.0
        %788 = vmatpush.msra.mxu0 0.0
        %v789 = vand.u32 %v698, 4294901760
        %v790 = vsub.f32 %v698, %v789
        %791 = vmatpush.msra.mxu0 %v790
        %v792 = vand.u32 %v697, 4294901760
        %v793 = vsub.f32 %v697, %v792
        %794 = vmatpush.msra.mxu0 %v793
        %v795 = vand.u32 %v696, 4294901760
        %v796 = vsub.f32 %v696, %v795
        %797 = vmatpush.msra.mxu0 %v796
        %v798 = vand.u32 %v695, 4294901760
        %v799 = vsub.f32 %v695, %v798
        %800 = vmatpush.msra.mxu0 %v799
        %v801 = vand.u32 %v705, 4294901760
        %v802 = vsub.f32 %v705, %v801
        %803 = vmatmul.f32.gmra.mxu0 %v802
        %v804 = vpop.f32.mrf.mxu0
        %v805 = vadd.f32 %v775, %v804
        %806 = vdwg.mxu0
        %807 = vmatpush.msra.mxu0 0.0
        %808 = vmatpush.msra.mxu0 0.0
        %809 = vmatpush.msra.mxu0 0.0
        %810 = vmatpush.msra.mxu0 0.0
        %811 = vmatpush.msra.mxu0 0.0
        %812 = vmatpush.msra.mxu0 0.0
        %813 = vmatpush.msra.mxu0 0.0
        %814 = vmatpush.msra.mxu0 0.0
        %815 = vmatpush.msra.mxu0 0.0
        %816 = vmatpush.msra.mxu0 0.0
        %817 = vmatpush.msra.mxu0 0.0
        %818 = vmatpush.msra.mxu0 0.0
        %v819 = vand.u32 %v698, 4294901760
        %820 = vmatpush.msra.mxu0 %v819
        %v821 = vand.u32 %v697, 4294901760
        %822 = vmatpush.msra.mxu0 %v821
        %v823 = vand.u32 %v696, 4294901760
        %824 = vmatpush.msra.mxu0 %v823
        %v825 = vand.u32 %v695, 4294901760
        %826 = vmatpush.msra.mxu0 %v825
        %v827 = vand.u32 %v705, 4294901760
        %v828 = vsub.f32 %v705, %v827
        %v829 = vand.u32 %v828, 4294901760
        %830 = vmatmul.f32.gmra.mxu0 %v829
        %v831 = vpop.f32.mrf.mxu0
        %v832 = vadd.f32 %v805, %v831
        %833 = vdwg.mxu0
        %834 = vmatpush.msra.mxu0 0.0
        %835 = vmatpush.msra.mxu0 0.0
        %836 = vmatpush.msra.mxu0 0.0
        %837 = vmatpush.msra.mxu0 0.0
        %838 = vmatpush.msra.mxu0 0.0
        %839 = vmatpush.msra.mxu0 0.0
        %840 = vmatpush.msra.mxu0 0.0
        %841 = vmatpush.msra.mxu0 0.0
        %842 = vmatpush.msra.mxu0 0.0
        %843 = vmatpush.msra.mxu0 0.0
        %844 = vmatpush.msra.mxu0 0.0
        %845 = vmatpush.msra.mxu0 0.0
        %v846 = vand.u32 %v698, 4294901760
        %v847 = vsub.f32 %v698, %v846
        %v848 = vand.u32 %v847, 4294901760
        %849 = vmatpush.msra.mxu0 %v848
        %v850 = vand.u32 %v697, 4294901760
        %v851 = vsub.f32 %v697, %v850
        %v852 = vand.u32 %v851, 4294901760
        %853 = vmatpush.msra.mxu0 %v852
        %v854 = vand.u32 %v696, 4294901760
        %v855 = vsub.f32 %v696, %v854
        %v856 = vand.u32 %v855, 4294901760
        %857 = vmatpush.msra.mxu0 %v856
        %v858 = vand.u32 %v695, 4294901760
        %v859 = vsub.f32 %v695, %v858
        %v860 = vand.u32 %v859, 4294901760
        %861 = vmatpush.msra.mxu0 %v860
        %v862 = vand.u32 %v705, 4294901760
        %863 = vmatmul.f32.gmra.mxu0 %v862
        %v864 = vpop.f32.mrf.mxu0
        %v865 = vadd.f32 %v832, %v864
        %866 = vdwg.mxu0
        %867 = vmatpush.msra.mxu0 0.0
        %868 = vmatpush.msra.mxu0 0.0
        %869 = vmatpush.msra.mxu0 0.0
        %870 = vmatpush.msra.mxu0 0.0
        %871 = vmatpush.msra.mxu0 0.0
        %872 = vmatpush.msra.mxu0 0.0
        %873 = vmatpush.msra.mxu0 0.0
        %874 = vmatpush.msra.mxu0 0.0
        %875 = vmatpush.msra.mxu0 0.0
        %876 = vmatpush.msra.mxu0 0.0
        %877 = vmatpush.msra.mxu0 0.0
        %878 = vmatpush.msra.mxu0 0.0
        %v879 = vand.u32 %v698, 4294901760
        %880 = vmatpush.msra.mxu0 %v879
        %v881 = vand.u32 %v697, 4294901760
        %882 = vmatpush.msra.mxu0 %v881
        %v883 = vand.u32 %v696, 4294901760
        %884 = vmatpush.msra.mxu0 %v883
        %v885 = vand.u32 %v695, 4294901760
        %886 = vmatpush.msra.mxu0 %v885
        %v887 = vand.u32 %v705, 4294901760
        %888 = vmatmul.f32.gmra.mxu0 %v887
        %v889 = vpop.f32.mrf.mxu0
        %v890 = vadd.f32 %v865, %v889
        %891 = vdwg.mxu0
        %892 = vst [vmem:[%s404] sm:$0xff] %v890
        %s893 = sand.u32 %s210, 1
        %s894 = scalar_lea.sflag [#allocation5], %s893
        %s895 = sand.u32 %s210, 1
        %s896 = smul.addr %s895, 8
        %s897 = scalar_lea.vmem [#allocation12], %s896
        // Predicated region
        $region73: #{tpu_custom_call.1} parent=47 // pred_check
          %p898 = pneg %p220
        $region74: #{tpu_custom_call.1} parent=47 // pred_check_branch
          %900 = sbr.rel (%p898) target = $region76
        $region75: #{tpu_custom_call.1} parent=47 // pred_region
          %902 = vsyncadd %s894, 0
          %s903 = smul.addr %s30, 2
          %s904 = sadd.s32 %s31, %s903
          %s905 = smul.addr %s904, 8
          %s906 = scalar_lea.hbm %s7, %s905
          %s908 = sshll.u32 %s897, 4
          %s909 = int_to_ptr.vmem [resolvable:$true] %s908
          %s910 = sshll.u32 %s906, 4
          %s911 = int_to_ptr.hbm [resolvable:$true] %s910
          %913 = dma.vmem_to_hbm [thread:$0]  %s909, 128, %s911, %s894
        $region76: #{tpu_custom_call.1} parent=47 // pred_fallthru
          _
      $region48: #{tpu_custom_call.1} parent=5 // pred_fallthru
        _
      %p914 = scmp.le.s32.totalorder 2, %s21
      // Predicated region
      $region77: #{tpu_custom_call.1} parent=5 // pred_check
        %p915 = pneg %p914
      $region78: #{tpu_custom_call.1} parent=5 // pred_check_branch
        %917 = sbr.rel (%p915) target = $region80
      $region79: #{tpu_custom_call.1} parent=5 // pred_region
        %s918 = ssub.s32 %s21, 2
        // Predicated region
        $region81: #{tpu_custom_call.1} parent=79 // pred_check
          %p919 = pneg %p226
        $region82: #{tpu_custom_call.1} parent=79 // pred_check_branch
          %921 = sbr.rel (%p919) target = $region84
        $region83: #{tpu_custom_call.1} parent=79 // pred_region
          %s922 = sand.u32 %s211, 1
          %s923 = scalar_lea.sflag [#allocation5], %s922
          %s924 = sand.u32 %s211, 1
          %s925 = smul.addr %s924, 8
          %s926 = scalar_lea.vmem [#allocation12], %s925
          %928 = dma.done %s923, 128
        $region84: #{tpu_custom_call.1} parent=79 // pred_fallthru
          _
      $region80: #{tpu_custom_call.1} parent=5 // pred_fallthru
        _
    $region6: #{tpu_custom_call.1} parent=1 // loop_footer
      %s25 = sadd.s32 1, %s21
    $region7: #{tpu_custom_call.1} parent=1 // loop_footer_branch
      %20 = sbr.rel target = $region3
    $region8: #{tpu_custom_call.1} parent=1 // loop_exit
      _
    %929 = vsyncpa [#allocation4], 1
    %s930 = scalar_lea.sflag [#allocation4], 1
    %931 = vsyncpa %s930, 1
    %932 = vsyncpa [#allocation7], 1
    %933 = vsyncpa [#allocation10], 1
    %934 = vsyncpa [#allocation5], 1
    %s935 = scalar_lea.sflag [#allocation5], 1
    %936 = vsyncpa %s935, 1

// kernel: tpu_custom_call.1
$region0: #{tpu_custom_call.1}
  #allocation0 [shape = 'u32[]', space=smem, size = 0x4, offset = 0x4, fixed_abs, tag = 'smem constant byte address 0x4 - core index']
  #allocation1 [shape = 'u32[72,128]{1,0:T(1,128)}', space=vmem, size = 0x9000, scoped, tag = 'internal scratch']
  #allocation2 [shape = 'f32[8,32]{1,0:T(8,128)}', space=vmem, size = 0x1000, scoped, tag = 'scratch operand']
  %s0 = inlined_call_operand.hbm [shape: f32[16,32], index: 0, kind: input, shape index: {}]
  %s1 = inlined_call_operand.hbm [shape: f32[32,32], index: 1, kind: input, shape index: {}]
  %s2 = inlined_call_operand.vmem [shape: f32[1,32], index: 2, kind: input, shape index: {}]
  %s3 = inlined_call_operand.hbm [shape: f32[1,32], index: 3, kind: input, shape index: {}]
  %s4 = inlined_call_operand.hbm [shape: f32[1,32], index: 4, kind: input, shape index: {}]
  %s5 = inlined_call_operand.hbm [shape: f32[32,256], index: 5, kind: input, shape index: {}]
  %s6 = inlined_call_operand.vmem [shape: f32[1,256], index: 6, kind: input, shape index: {}]
  %s7 = inlined_call_operand.hbm [shape: f32[16,256], index: 7, kind: output, shape index: {}]
  %s8 = sld [smem:[#allocation0]]
  $region85: #{tpu_custom_call.1} parent=0
    _
  %s10 = ssub.s32 1, %s8
  %s11 = scalar_select 0, %s10, %s8
  $region1: #{tpu_custom_call.1} parent=0
    #allocation3 [shape = 'u8[8192]{0}', space=vmem, size = 0x2000, scoped, tag = 'input window, operand 0']
    #allocation4 [shape = 's32[2]{0}', space=sflag, size = 0x8, scoped, tag = 'scoped memory for tpu_custom_call.1']
    #allocation5 [shape = 's32[2]{0}', space=sflag, size = 0x8, scoped, tag = 'scoped memory for tpu_custom_call.1']
    #allocation6 [shape = 'u8[16384]{0}', space=vmem, size = 0x4000, scoped, tag = 'input window, operand 1, single buffered']
    #allocation7 [shape = 's32[1]{0}', space=sflag, size = 0x4, scoped, tag = 'scoped memory for tpu_custom_call.1']
    #allocation8 [shape = 'u8[512]{0}', space=vmem, size = 0x400, scoped, tag = 'input window, operand 3, single buffered']
    #allocation9 [shape = 'u8[512]{0}', space=vmem, size = 0x400, scoped, tag = 'input window, operand 4, single buffered']
    #allocation10 [shape = 's32[1]{0}', space=sflag, size = 0x4, scoped, tag = 'scoped memory for tpu_custom_call.1']
    #allocation11 [shape = 'u8[32768]{0}', space=vmem, size = 0x8000, scoped, tag = 'input window, operand 5']
    #allocation12 [shape = 'u8[8192]{0}', space=vmem, size = 0x2000, scoped, tag = 'output window, operand 0']
    %12 = vsyncpa [#allocation4], 0
    %s13 = scalar_lea.sflag [#allocation4], 1
    %14 = vsyncpa %s13, 0
    %15 = vsyncpa [#allocation7], 0
    %16 = vsyncpa [#allocation10], 0
    %17 = vsyncpa [#allocation5], 0
    %s18 = scalar_lea.sflag [#allocation5], 1
    %19 = vsyncpa %s18, 0
    loop: start=0, step=1, limit=6
    $region2: #{tpu_custom_call.1} parent=1 // loop_pre_header
      _
    $region3: #{tpu_custom_call.1} parent=1 // loop_header
      %s21 = sphi 0, %s25
      %p22 = scmp.ge.s32.totalorder %s21, 6
      %s28 = sphi 0, %s40
      %s29 = sphi 0, %s36
      %s30 = sphi 0, %s28
      %s31 = sphi 0, %s29
      %s32 = sphi 0, %s30
      %s33 = sphi 0, %s31
      %s43 = sphi 0, %s45
      %s46 = sphi 0, %s43
      %s47 = sphi 0, %s46
      %s63 = sphi 0, %s47
      %s67 = sphi 0, %s67
      %s69 = sphi 0, %s67
      %s70 = sphi 0, %s69
      %s84 = sphi 0, %s70
      %s88 = sphi 0, %s88
      %s90 = sphi 0, %s88
      %s91 = sphi 0, %s90
      %s105 = sphi 0, %s91
      %s109 = sphi 0, %s109
      %s111 = sphi 0, %s109
      %s112 = sphi 0, %s111
      %s126 = sphi 0, %s112
      %s130 = sphi 0, %s130
      %s132 = sphi 0, %s130
      %s133 = sphi 0, %s132
      %s147 = sphi 0, %s133
      %s153 = sphi 0, %s155
      %s156 = sphi 0, %s153
      %s157 = sphi 0, %s156
      %s173 = sphi 0, %s157
      %s179 = sphi 0, %s181
      %s182 = sphi 0, %s179
      %s183 = sphi 0, %s182
      %s199 = sphi 0, %s183
      %s207 = sphi 0, %s209
      %s210 = sphi 0, %s207
      %s211 = sphi 0, %s210
      %s227 = sphi 0, %s211
    $region4: #{tpu_custom_call.1} parent=1 // loop_header_branch
      %24 = sbr.rel (%p22) target = $region8
    $region5: #{tpu_custom_call.1} parent=1 // loop_body
      %s26 = ssub.s32 %s21, 1
      %s27 = ssub.s32 %s21, 2
      %s34 = sadd.s32 1, %s29
      %p35 = scmp.ge.s32.totalorder %s34, 2
      %s36 = scalar_select %p35, 0, %s34
      %s37 = sadd.s32 1, %s28
      %s38 = scalar_select %p35, %s37, %s28
      %p39 = scmp.ge.s32.totalorder %s38, 2
      %s40 = scalar_select %p39, 0, %s38
      %s41 = ssub.s32 %s28, %s40
      %p42 = scmp.eq.s32.totalorder %s41, 0
      %s44 = sadd.s32 %s43, 1
      %s45 = scalar_select %p42, %s43, %s44
      %p48 = pneg %p42
      %p49 = scmp.eq.s32.totalorder %s21, 3
      %p50 = por %p48, %p49
      %p51 = scmp.ne.s32.totalorder %s43, %s46
      %p52 = scmp.eq.s32.totalorder %s21, 0
      %p53 = por %p51, %p52
      %p54 = scmp.ne.s32.totalorder %s43, %s46
      %p55 = scmp.eq.s32.totalorder %s26, 3
      %p56 = por %p54, %p55
      %p57 = scmp.ne.s32.totalorder %s46, %s47
      %p58 = scmp.eq.s32.totalorder %s26, 0
      %p59 = por %p57, %p58
      %p60 = scmp.ne.s32.totalorder %s46, %s47
      %p61 = scmp.eq.s32.totalorder %s27, 3
      %p62 = por %p60, %p61
      %p64 = scmp.ne.s32.totalorder %s47, %s63
      %p65 = scmp.eq.s32.totalorder %s27, 0
      %p66 = por %p64, %p65
      %s68 = sadd.s32 %s67, 1
      %p71 = scmp.eq.s32.totalorder %s21, 3
      %p72 = scmp.ne.s32.totalorder %s67, %s69
      %p73 = scmp.eq.s32.totalorder %s21, 0
      %p74 = por %p72, %p73
      %p75 = scmp.ne.s32.totalorder %s67, %s69
      %p76 = scmp.eq.s32.totalorder %s26, 3
      %p77 = por %p75, %p76
      %p78 = scmp.ne.s32.totalorder %s69, %s70
      %p79 = scmp.eq.s32.totalorder %s26, 0
      %p80 = por %p78, %p79
      %p81 = scmp.ne.s32.totalorder %s69, %s70
      %p82 = scmp.eq.s32.totalorder %s27, 3
      %p83 = por %p81, %p82
      %p85 = scmp.ne.s32.totalorder %s70, %s84
      %p86 = scmp.eq.s32.totalorder %s27, 0
      %p87 = por %p85, %p86
      %s89 = sadd.s32 %s88, 1
      %p92 = scmp.eq.s32.totalorder %s21, 3
      %p93 = scmp.ne.s32.totalorder %s88, %s90
      %p94 = scmp.eq.s32.totalorder %s21, 0
      %p95 = por %p93, %p94
      %p96 = scmp.ne.s32.totalorder %s88, %s90
      %p97 = scmp.eq.s32.totalorder %s26, 3
      %p98 = por %p96, %p97
      %p99 = scmp.ne.s32.totalorder %s90, %s91
      %p100 = scmp.eq.s32.totalorder %s26, 0
      %p101 = por %p99, %p100
      %p102 = scmp.ne.s32.totalorder %s90, %s91
      %p103 = scmp.eq.s32.totalorder %s27, 3
      %p104 = por %p102, %p103
      %p106 = scmp.ne.s32.totalorder %s91, %s105
      %p107 = scmp.eq.s32.totalorder %s27, 0
      %p108 = por %p106, %p107
      %s110 = sadd.s32 %s109, 1
      %p113 = scmp.eq.s32.totalorder %s21, 3
      %p114 = scmp.ne.s32.totalorder %s109, %s111
      %p115 = scmp.eq.s32.totalorder %s21, 0
      %p116 = por %p114, %p115
      %p117 = scmp.ne.s32.totalorder %s109, %s111
      %p118 = scmp.eq.s32.totalorder %s26, 3
      %p119 = por %p117, %p118
      %p120 = scmp.ne.s32.totalorder %s111, %s112
      %p121 = scmp.eq.s32.totalorder %s26, 0
      %p122 = por %p120, %p121
      %p123 = scmp.ne.s32.totalorder %s111, %s112
      %p124 = scmp.eq.s32.totalorder %s27, 3
      %p125 = por %p123, %p124
      %p127 = scmp.ne.s32.totalorder %s112, %s126
      %p128 = scmp.eq.s32.totalorder %s27, 0
      %p129 = por %p127, %p128
      %s131 = sadd.s32 %s130, 1
      %p134 = scmp.eq.s32.totalorder %s21, 3
      %p135 = scmp.ne.s32.totalorder %s130, %s132
      %p136 = scmp.eq.s32.totalorder %s21, 0
      %p137 = por %p135, %p136
      %p138 = scmp.ne.s32.totalorder %s130, %s132
      %p139 = scmp.eq.s32.totalorder %s26, 3
      %p140 = por %p138, %p139
      %p141 = scmp.ne.s32.totalorder %s132, %s133
      %p142 = scmp.eq.s32.totalorder %s26, 0
      %p143 = por %p141, %p142
      %p144 = scmp.ne.s32.totalorder %s132, %s133
      %p145 = scmp.eq.s32.totalorder %s27, 3
      %p146 = por %p144, %p145
      %p148 = scmp.ne.s32.totalorder %s133, %s147
      %p149 = scmp.eq.s32.totalorder %s27, 0
      %p150 = por %p148, %p149
      %s151 = ssub.s32 %s29, %s36
      %p152 = scmp.eq.s32.totalorder %s151, 0
      %s154 = sadd.s32 %s153, 1
      %s155 = scalar_select %p152, %s153, %s154
      %p158 = pneg %p152
      %p159 = scmp.eq.s32.totalorder %s21, 3
      %p160 = por %p158, %p159
      %p161 = scmp.ne.s32.totalorder %s153, %s156
      %p162 = scmp.eq.s32.totalorder %s21, 0
      %p163 = por %p161, %p162
      %p164 = scmp.ne.s32.totalorder %s153, %s156
      %p165 = scmp.eq.s32.totalorder %s26, 3
      %p166 = por %p164, %p165
      %p167 = scmp.ne.s32.totalorder %s156, %s157
      %p168 = scmp.eq.s32.totalorder %s26, 0
      %p169 = por %p167, %p168
      %p170 = scmp.ne.s32.totalorder %s156, %s157
      %p171 = scmp.eq.s32.totalorder %s27, 3
      %p172 = por %p170, %p171
      %p174 = scmp.ne.s32.totalorder %s157, %s173
      %p175 = scmp.eq.s32.totalorder %s27, 0
      %p176 = por %p174, %p175
      %s177 = ssub.s32 %s29, %s36
      %p178 = scmp.eq.s32.totalorder %s177, 0
      %s180 = sadd.s32 %s179, 1
      %s181 = scalar_select %p178, %s179, %s180
      %p184 = pneg %p178
      %p185 = scmp.eq.s32.totalorder %s21, 3
      %p186 = por %p184, %p185
      %p187 = scmp.ne.s32.totalorder %s179, %s182
      %p188 = scmp.eq.s32.totalorder %s21, 0
      %p189 = por %p187, %p188
      %p190 = scmp.ne.s32.totalorder %s179, %s182
      %p191 = scmp.eq.s32.totalorder %s26, 3
      %p192 = por %p190, %p191
      %p193 = scmp.ne.s32.totalorder %s182, %s183
      %p194 = scmp.eq.s32.totalorder %s26, 0
      %p195 = por %p193, %p194
      %p196 = scmp.ne.s32.totalorder %s182, %s183
      %p197 = scmp.eq.s32.totalorder %s27, 3
      %p198 = por %p196, %p197
      %p200 = scmp.ne.s32.totalorder %s183, %s199
      %p201 = scmp.eq.s32.totalorder %s27, 0
      %p202 = por %p200, %p201
      %s203 = ssub.s32 %s28, %s40
      %s204 = ssub.s32 %s29, %s36
      %s205 = sor.u32 %s203, %s204
      %p206 = scmp.eq.s32.totalorder %s205, 0
      %s208 = sadd.s32 %s207, 1
      %s209 = scalar_select %p206, %s207, %s208
      %p212 = pneg %p206
      %p213 = scmp.eq.s32.totalorder %s21, 3
      %p214 = por %p212, %p213
      %p215 = scmp.ne.s32.totalorder %s207, %s210
      %p216 = scmp.eq.s32.totalorder %s21, 0
      %p217 = por %p215, %p216
      %p218 = scmp.ne.s32.totalorder %s207, %s210
      %p219 = scmp.eq.s32.totalorder %s26, 3
      %p220 = por %p218, %p219
      %p221 = scmp.ne.s32.totalorder %s210, %s211
      %p222 = scmp.eq.s32.totalorder %s26, 0
      %p223 = por %p221, %p222
      %p224 = scmp.ne.s32.totalorder %s210, %s211
      %p225 = scmp.eq.s32.totalorder %s27, 3
      %p226 = por %p224, %p225
      %p228 = scmp.ne.s32.totalorder %s211, %s227
      %p229 = scmp.eq.s32.totalorder %s27, 0
      %p230 = por %p228, %p229
      %p231 = scmp.le.s32.totalorder 1, %s21
      %p232 = scmp.lt.s32.totalorder %s21, 5
      %p233 = pnand %p231, %p232
      %p234 = pneg %p233
      // Predicated region
      $region9: #{tpu_custom_call.1} parent=5 // pred_check
        _
      $region10: #{tpu_custom_call.1} parent=5 // pred_check_branch
        %236 = sbr.rel (%p233) target = $region12
      $region11: #{tpu_custom_call.1} parent=5 // pred_region
        %s237 = ssub.s32 %s21, 1
        // Predicated region
        $region13: #{tpu_custom_call.1} parent=11 // pred_check
          %p238 = pneg %p80
        $region14: #{tpu_custom_call.1} parent=11 // pred_check_branch
          %240 = sbr.rel (%p238) target = $region16
        $region15: #{tpu_custom_call.1} parent=11 // pred_region
          %242 = vsyncadd [#allocation7], 0
          %s243 = sshll.u32 %s1, 4
          %s244 = int_to_ptr.hbm [resolvable:$true] %s243
          %s245 = sshll.u32 [#allocation6], 4
          %s246 = int_to_ptr.vmem [resolvable:$true] %s245
          %251 = dma.hbm_to_vmem [thread:$0]  %s244, 512, %s246, [#allocation7], 128, 128, 8
        $region16: #{tpu_custom_call.1} parent=11 // pred_fallthru
          _
        // Predicated region
        $region17: #{tpu_custom_call.1} parent=11 // pred_check
          %p252 = pneg %p101
        $region18: #{tpu_custom_call.1} parent=11 // pred_check_branch
          %254 = sbr.rel (%p252) target = $region20
        $region19: #{tpu_custom_call.1} parent=11 // pred_region
          _
        $region20: #{tpu_custom_call.1} parent=11 // pred_fallthru
          _
        // Predicated region
        $region21: #{tpu_custom_call.1} parent=11 // pred_check
          %p255 = pneg %p122
        $region22: #{tpu_custom_call.1} parent=11 // pred_check_branch
          %257 = sbr.rel (%p255) target = $region24
        $region23: #{tpu_custom_call.1} parent=11 // pred_region
          %259 = vsyncadd [#allocation7], 0
          %s261 = sshll.u32 %s3, 4
          %s262 = int_to_ptr.hbm [resolvable:$true] %s261
          %s263 = sshll.u32 [#allocation8], 4
          %s264 = int_to_ptr.vmem [resolvable:$true] %s263
          %266 = dma.hbm_to_vmem [thread:$0]  %s262, 16, %s264, [#allocation7]
        $region24: #{tpu_custom_call.1} parent=11 // pred_fallthru
          _
        // Predicated region
        $region25: #{tpu_custom_call.1} parent=11 // pred_check
          %p267 = pneg %p143
        $region26: #{tpu_custom_call.1} parent=11 // pred_check_branch
          %269 = sbr.rel (%p267) target = $region28
        $region27: #{tpu_custom_call.1} parent=11 // pred_region
          %271 = vsyncadd [#allocation10], 0
          %s273 = sshll.u32 %s4, 4
          %s274 = int_to_ptr.hbm [resolvable:$true] %s273
          %s275 = sshll.u32 [#allocation9], 4
          %s276 = int_to_ptr.vmem [resolvable:$true] %s275
          %278 = dma.hbm_to_vmem [thread:$0]  %s274, 16, %s276, [#allocation10]
        $region28: #{tpu_custom_call.1} parent=11 // pred_fallthru
          _
      $region12: #{tpu_custom_call.1} parent=5 // pred_fallthru
        _
      %p279 = scmp.lt.s32.totalorder %s21, 4
      // Predicated region
      $region29: #{tpu_custom_call.1} parent=5 // pred_check
        %p280 = pneg %p279
      $region30: #{tpu_custom_call.1} parent=5 // pred_check_branch
        %282 = sbr.rel (%p280) target = $region32
      $region31: #{tpu_custom_call.1} parent=5 // pred_region
        // Predicated region
        $region33: #{tpu_custom_call.1} parent=31 // pred_check
          %p283 = pneg %p53
        $region34: #{tpu_custom_call.1} parent=31 // pred_check_branch
          %285 = sbr.rel (%p283) target = $region36
        $region35: #{tpu_custom_call.1} parent=31 // pred_region
          %s286 = sand.u32 %s21, 1
          %s287 = scalar_lea.sflag [#allocation4], %s286
          %s288 = sand.u32 %s43, 1
          %s289 = smul.addr %s288, 8
          %s290 = scalar_lea.vmem [#allocation3], %s289
          %292 = vsyncadd %s287, 0
          %s293 = smul.addr %s28, 8
          %s294 = scalar_lea.hbm %s0, %s293
          %s296 = sshll.u32 %s294, 4
          %s297 = int_to_ptr.hbm [resolvable:$true] %s296
          %s298 = sshll.u32 %s290, 4
          %s299 = int_to_ptr.vmem [resolvable:$true] %s298
          %301 = dma.hbm_to_vmem [thread:$0]  %s297, 128, %s299, %s287
        $region36: #{tpu_custom_call.1} parent=31 // pred_fallthru
          _
        // Predicated region
        $region37: #{tpu_custom_call.1} parent=31 // pred_check
          %p302 = pneg %p163
        $region38: #{tpu_custom_call.1} parent=31 // pred_check_branch
          %304 = sbr.rel (%p302) target = $region40
        $region39: #{tpu_custom_call.1} parent=31 // pred_region
          %s305 = sand.u32 %s21, 1
          %s306 = scalar_lea.sflag [#allocation4], %s305
          %s307 = sand.u32 %s153, 1
          %s308 = smul.addr %s307, 32
          %s309 = scalar_lea.vmem [#allocation11], %s308
          %311 = vsyncadd %s306, 0
          %s312 = smul.addr %s29, 8
          %s313 = scalar_lea.hbm %s5, %s312
          %s314 = sshll.u32 %s313, 4
          %s315 = int_to_ptr.hbm [resolvable:$true] %s314
          %s316 = sshll.u32 %s309, 4
          %s317 = int_to_ptr.vmem [resolvable:$true] %s316
          %322 = dma.hbm_to_vmem [thread:$0]  %s315, 512, %s317, %s306, 256, 128, 8
        $region40: #{tpu_custom_call.1} parent=31 // pred_fallthru
          _
        // Predicated region
        $region41: #{tpu_custom_call.1} parent=31 // pred_check
          %p323 = pneg %p189
        $region42: #{tpu_custom_call.1} parent=31 // pred_check_branch
          %325 = sbr.rel (%p323) target = $region44
        $region43: #{tpu_custom_call.1} parent=31 // pred_region
          %p326 = scmp.lt.s32.totalorder %s29, 1
          %s327 = scalar_select %p326, %s29, 1
          %s328 = scalar_lea.vmem %s6, %s327
        $region44: #{tpu_custom_call.1} parent=31 // pred_fallthru
          _
      $region32: #{tpu_custom_call.1} parent=5 // pred_fallthru
        _
      %p329 = scmp.le.s32.totalorder 1, %s21
      %p330 = scmp.lt.s32.totalorder %s21, 5
      %p331 = pnand %p329, %p330
      %p332 = pneg %p331
      // Predicated region
      $region45: #{tpu_custom_call.1} parent=5 // pred_check
        _
      $region46: #{tpu_custom_call.1} parent=5 // pred_check_branch
        %334 = sbr.rel (%p331) target = $region48
      $region47: #{tpu_custom_call.1} parent=5 // pred_region
        %s335 = ssub.s32 %s21, 1
        %s336 = sand.u32 %s26, 1
        %s337 = scalar_lea.sflag [#allocation4], %s336
        %s338 = sand.u32 %s46, 1
        %s339 = smul.addr %s338, 8
        %s340 = scalar_lea.vmem [#allocation3], %s339
        // Predicated region
        $region49: #{tpu_custom_call.1} parent=47 // pred_check
          %p341 = pneg %p59
        $region50: #{tpu_custom_call.1} parent=47 // pred_check_branch
          %343 = sbr.rel (%p341) target = $region52
        $region51: #{tpu_custom_call.1} parent=47 // pred_region
          %345 = dma.done %s337, 128
        $region52: #{tpu_custom_call.1} parent=47 // pred_fallthru
          _
        // Predicated region
        $region53: #{tpu_custom_call.1} parent=47 // pred_check
          %p346 = pneg %p80
        $region54: #{tpu_custom_call.1} parent=47 // pred_check_branch
          %348 = sbr.rel (%p346) target = $region56
        $region55: #{tpu_custom_call.1} parent=47 // pred_region
          %350 = dma.done [#allocation7], 512
        $region56: #{tpu_custom_call.1} parent=47 // pred_fallthru
          _
        // Predicated region
        $region57: #{tpu_custom_call.1} parent=47 // pred_check
          %p351 = pneg %p122
        $region58: #{tpu_custom_call.1} parent=47 // pred_check_branch
          %353 = sbr.rel (%p351) target = $region60
        $region59: #{tpu_custom_call.1} parent=47 // pred_region
          %355 = dma.done [#allocation7], 16
        $region60: #{tpu_custom_call.1} parent=47 // pred_fallthru
          _
        // Predicated region
        $region61: #{tpu_custom_call.1} parent=47 // pred_check
          %p356 = pneg %p143
        $region62: #{tpu_custom_call.1} parent=47 // pred_check_branch
          %358 = sbr.rel (%p356) target = $region64
        $region63: #{tpu_custom_call.1} parent=47 // pred_region
          %360 = dma.done [#allocation10], 16
        $region64: #{tpu_custom_call.1} parent=47 // pred_fallthru
          _
        %s361 = sand.u32 %s26, 1
        %s362 = scalar_lea.sflag [#allocation4], %s361
        %s363 = sand.u32 %s156, 1
        %s364 = smul.addr %s363, 32
        %s365 = scalar_lea.vmem [#allocation11], %s364
        // Predicated region
        $region65: #{tpu_custom_call.1} parent=47 // pred_check
          %p366 = pneg %p169
        $region66: #{tpu_custom_call.1} parent=47 // pred_check_branch
          %368 = sbr.rel (%p366) target = $region68
        $region67: #{tpu_custom_call.1} parent=47 // pred_region
          %370 = dma.done %s362, 512
        $region68: #{tpu_custom_call.1} parent=47 // pred_fallthru
          _
        %s371 = sand.u32 %s26, 1
        %s372 = scalar_lea.sflag [#allocation4], %s371
        %s373 = sand.u32 %s46, 1
        %s374 = smul.addr %s373, 8
        %s375 = scalar_lea.vmem [#allocation3], %s374
        %p376 = pneg %p59
        %p377 = pneg %p56
        %p378 = pneg %p80
        %p379 = pneg %p77
        %p380 = pneg %p101
        %p381 = pneg %p98
        %p382 = pneg %p122
        %p383 = pneg %p119
        %p384 = pneg %p143
        %p385 = pneg %p140
        %s386 = sand.u32 %s26, 1
        %s387 = scalar_lea.sflag [#allocation4], %s386
        %s388 = sand.u32 %s156, 1
        %s389 = smul.addr %s388, 32
        %s390 = scalar_lea.vmem [#allocation11], %s389
        %p391 = pneg %p169
        %p392 = pneg %p166
        %p393 = scmp.lt.s32.totalorder %s31, 1
        %s394 = scalar_select %p393, %s31, 1
        %s395 = scalar_lea.vmem %s6, %s394
        %p396 = pneg %p195
        %p397 = pneg %p192
        %p398 = pneg %p223
        %p399 = pneg %p220
        %s400 = sand.u32 %s210, 1
        %s401 = scalar_lea.sflag [#allocation5], %s400
        %s402 = sand.u32 %s210, 1
        %s403 = smul.addr %s402, 8
        %s404 = scalar_lea.vmem [#allocation12], %s403
        %p405 = scmp.lt.s32.totalorder %s31, 1
        %s406 = scalar_select %p405, %s31, 1
        %s407 = scalar_lea.vmem %s6, %s406
        %p408 = scmp.eq.s32.totalorder %s31, 0
        // Predicated region
        $region69: #{tpu_custom_call.1} parent=47 // pred_check
          %p409 = pneg %p408
        $region70: #{tpu_custom_call.1} parent=47 // pred_check_branch
          %411 = sbr.rel (%p409) target = $region72
        $region71: #{tpu_custom_call.1} parent=47 // pred_region
          %v412 = vld [vmem:[%s340] sm:$0xff]
          %v413 = vld [vmem:[#allocation6] sm:$0xff]
          %v414 = vld [vmem:[#allocation6 + $0x8] sm:$0xff]
          %v415 = vld [vmem:[#allocation6 + $0x10] sm:$0xff]
          %v416 = vld [vmem:[#allocation6 + $0x18] sm:$0xff]
          %v417 = vld [vmem:[%s2] sm:$0x1]
          %v419 = vperm.slane %v417, 0
          %vm421 = vcmask 261120
          %v423 = vsel %vm421, %v412, 0
          %425 = vmatpush.msra.mxu0 0.0
          %426 = vmatpush.msra.mxu0 0.0
          %427 = vmatpush.msra.mxu0 0.0
          %428 = vmatpush.msra.mxu0 0.0
          %429 = vmatpush.msra.mxu0 0.0
          %430 = vmatpush.msra.mxu0 0.0
          %431 = vmatpush.msra.mxu0 0.0
          %432 = vmatpush.msra.mxu0 0.0
          %433 = vmatpush.msra.mxu0 0.0
          %434 = vmatpush.msra.mxu0 0.0
          %435 = vmatpush.msra.mxu0 0.0
          %436 = vmatpush.msra.mxu0 0.0
          %v437 = vand.u32 %v416, 4294901760
          %438 = vmatpush.msra.mxu0 %v437
          %v439 = vand.u32 %v415, 4294901760
          %440 = vmatpush.msra.mxu0 %v439
          %v441 = vand.u32 %v414, 4294901760
          %442 = vmatpush.msra.mxu0 %v441
          %v443 = vand.u32 %v413, 4294901760
          %444 = vmatpush.msra.mxu0 %v443
          %v445 = vand.u32 %v423, 4294901760
          %v446 = vsub.f32 %v423, %v445
          %v447 = vand.u32 %v446, 4294901760
          %v448 = vsub.f32 %v446, %v447
          %v449 = vand.u32 %v448, 4294901760
          %450 = vmatmul.f32.gmra.mxu0 %v449
          %v451 = vpop.f32.mrf.mxu0
          %v452 = vadd.f32 %v419, %v451
          %453 = vdwg.mxu0
          %454 = vmatpush.msra.mxu0 0.0
          %455 = vmatpush.msra.mxu0 0.0
          %456 = vmatpush.msra.mxu0 0.0
          %457 = vmatpush.msra.mxu0 0.0
          %458 = vmatpush.msra.mxu0 0.0
          %459 = vmatpush.msra.mxu0 0.0
          %460 = vmatpush.msra.mxu0 0.0
          %461 = vmatpush.msra.mxu0 0.0
          %462 = vmatpush.msra.mxu0 0.0
          %463 = vmatpush.msra.mxu0 0.0
          %464 = vmatpush.msra.mxu0 0.0
          %465 = vmatpush.msra.mxu0 0.0
          %v466 = vand.u32 %v416, 4294901760
          %v467 = vsub.f32 %v416, %v466
          %v468 = vand.u32 %v467, 4294901760
          %v469 = vsub.f32 %v467, %v468
          %v470 = vand.u32 %v469, 4294901760
          %471 = vmatpush.msra.mxu0 %v470
          %v472 = vand.u32 %v415, 4294901760
          %v473 = vsub.f32 %v415, %v472
          %v474 = vand.u32 %v473, 4294901760
          %v475 = vsub.f32 %v473, %v474
          %v476 = vand.u32 %v475, 4294901760
          %477 = vmatpush.msra.mxu0 %v476
          %v478 = vand.u32 %v414, 4294901760
          %v479 = vsub.f32 %v414, %v478
          %v480 = vand.u32 %v479, 4294901760
          %v481 = vsub.f32 %v479, %v480
          %v482 = vand.u32 %v481, 4294901760
          %483 = vmatpush.msra.mxu0 %v482
          %v484 = vand.u32 %v413, 4294901760
          %v485 = vsub.f32 %v413, %v484
          %v486 = vand.u32 %v485, 4294901760
          %v487 = vsub.f32 %v485, %v486
          %v488 = vand.u32 %v487, 4294901760
          %489 = vmatpush.msra.mxu0 %v488
          %v490 = vand.u32 %v423, 4294901760
          %491 = vmatmul.f32.gmra.mxu0 %v490
          %v492 = vpop.f32.mrf.mxu0
          %v493 = vadd.f32 %v452, %v492
          %494 = vdwg.mxu0
          %495 = vmatpush.msra.mxu0 0.0
          %496 = vmatpush.msra.mxu0 0.0
          %497 = vmatpush.msra.mxu0 0.0
          %498 = vmatpush.msra.mxu0 0.0
          %499 = vmatpush.msra.mxu0 0.0
          %500 = vmatpush.msra.mxu0 0.0
          %501 = vmatpush.msra.mxu0 0.0
          %502 = vmatpush.msra.mxu0 0.0
          %503 = vmatpush.msra.mxu0 0.0
          %504 = vmatpush.msra.mxu0 0.0
          %505 = vmatpush.msra.mxu0 0.0
          %506 = vmatpush.msra.mxu0 0.0
          %v507 = vand.u32 %v416, 4294901760
          %v508 = vsub.f32 %v416, %v507
          %509 = vmatpush.msra.mxu0 %v508
          %v510 = vand.u32 %v415, 4294901760
          %v511 = vsub.f32 %v415, %v510
          %512 = vmatpush.msra.mxu0 %v511
          %v513 = vand.u32 %v414, 4294901760
          %v514 = vsub.f32 %v414, %v513
          %515 = vmatpush.msra.mxu0 %v514
          %v516 = vand.u32 %v413, 4294901760
          %v517 = vsub.f32 %v413, %v516
          %518 = vmatpush.msra.mxu0 %v517
          %v519 = vand.u32 %v423, 4294901760
          %v520 = vsub.f32 %v423, %v519
          %521 = vmatmul.f32.gmra.mxu0 %v520
          %v522 = vpop.f32.mrf.mxu0
          %v523 = vadd.f32 %v493, %v522
          %524 = vdwg.mxu0
          %525 = vmatpush.msra.mxu0 0.0
          %526 = vmatpush.msra.mxu0 0.0
          %527 = vmatpush.msra.mxu0 0.0
          %528 = vmatpush.msra.mxu0 0.0
          %529 = vmatpush.msra.mxu0 0.0
          %530 = vmatpush.msra.mxu0 0.0
          %531 = vmatpush.msra.mxu0 0.0
          %532 = vmatpush.msra.mxu0 0.0
          %533 = vmatpush.msra.mxu0 0.0
          %534 = vmatpush.msra.mxu0 0.0
          %535 = vmatpush.msra.mxu0 0.0
          %536 = vmatpush.msra.mxu0 0.0
          %v537 = vand.u32 %v416, 4294901760
          %538 = vmatpush.msra.mxu0 %v537
          %v539 = vand.u32 %v415, 4294901760
          %540 = vmatpush.msra.mxu0 %v539
          %v541 = vand.u32 %v414, 4294901760
          %542 = vmatpush.msra.mxu0 %v541
          %v543 = vand.u32 %v413, 4294901760
          %544 = vmatpush.msra.mxu0 %v543
          %v545 = vand.u32 %v423, 4294901760
          %v546 = vsub.f32 %v423, %v545
          %v547 = vand.u32 %v546, 4294901760
          %548 = vmatmul.f32.gmra.mxu0 %v547
          %v549 = vpop.f32.mrf.mxu0
          %v550 = vadd.f32 %v523, %v549
          %551 = vdwg.mxu0
          %552 = vmatpush.msra.mxu0 0.0
          %553 = vmatpush.msra.mxu0 0.0
          %554 = vmatpush.msra.mxu0 0.0
          %555 = vmatpush.msra.mxu0 0.0
          %556 = vmatpush.msra.mxu0 0.0
          %557 = vmatpush.msra.mxu0 0.0
          %558 = vmatpush.msra.mxu0 0.0
          %559 = vmatpush.msra.mxu0 0.0
          %560 = vmatpush.msra.mxu0 0.0
          %561 = vmatpush.msra.mxu0 0.0
          %562 = vmatpush.msra.mxu0 0.0
          %563 = vmatpush.msra.mxu0 0.0
          %v564 = vand.u32 %v416, 4294901760
          %v565 = vsub.f32 %v416, %v564
          %v566 = vand.u32 %v565, 4294901760
          %567 = vmatpush.msra.mxu0 %v566
          %v568 = vand.u32 %v415, 4294901760
          %v569 = vsub.f32 %v415, %v568
          %v570 = vand.u32 %v569, 4294901760
          %571 = vmatpush.msra.mxu0 %v570
          %v572 = vand.u32 %v414, 4294901760
          %v573 = vsub.f32 %v414, %v572
          %v574 = vand.u32 %v573, 4294901760
          %575 = vmatpush.msra.mxu0 %v574
          %v576 = vand.u32 %v413, 4294901760
          %v577 = vsub.f32 %v413, %v576
          %v578 = vand.u32 %v577, 4294901760
          %579 = vmatpush.msra.mxu0 %v578
          %v580 = vand.u32 %v423, 4294901760
          %581 = vmatmul.f32.gmra.mxu0 %v580
          %v582 = vpop.f32.mrf.mxu0
          %v583 = vadd.f32 %v550, %v582
          %584 = vdwg.mxu0
          %585 = vmatpush.msra.mxu0 0.0
          %586 = vmatpush.msra.mxu0 0.0
          %587 = vmatpush.msra.mxu0 0.0
          %588 = vmatpush.msra.mxu0 0.0
          %589 = vmatpush.msra.mxu0 0.0
          %590 = vmatpush.msra.mxu0 0.0
          %591 = vmatpush.msra.mxu0 0.0
          %592 = vmatpush.msra.mxu0 0.0
          %593 = vmatpush.msra.mxu0 0.0
          %594 = vmatpush.msra.mxu0 0.0
          %595 = vmatpush.msra.mxu0 0.0
          %596 = vmatpush.msra.mxu0 0.0
          %v597 = vand.u32 %v416, 4294901760
          %598 = vmatpush.msra.mxu0 %v597
          %v599 = vand.u32 %v415, 4294901760
          %600 = vmatpush.msra.mxu0 %v599
          %v601 = vand.u32 %v414, 4294901760
          %602 = vmatpush.msra.mxu0 %v601
          %v603 = vand.u32 %v413, 4294901760
          %604 = vmatpush.msra.mxu0 %v603
          %v605 = vand.u32 %v423, 4294901760
          %606 = vmatmul.f32.gmra.mxu0 %v605
          %v607 = vpop.f32.mrf.mxu0
          %v608 = vadd.f32 %v583, %v607
          %609 = vdwg.mxu0
          %v610 = vmul.f32 %v608, 0.5
          %v611 = vmul.f32 %v608, 0.70710677
          %v612 = vmul.f32 %v611, %v611
          %v613 = vmin.f32 16.0, %v612
          %v614 = vmul.f32 %v613, 2.1237322e-06
          %v615 = vadd.f32 %v614, 0.00028619796
          %v616 = vmul.f32 %v613, %v615
          %v617 = vadd.f32 %v616, 0.0036580483
          %v618 = vmul.f32 %v613, %v617
          %v619 = vadd.f32 %v618, 0.05243302
          %v620 = vmul.f32 %v613, %v619
          %v621 = vadd.f32 %v620, 0.18741608
          %v622 = vmul.f32 %v613, %v621
          %v623 = vadd.f32 %v622, 1.1283791
          %v624 = vmul.f32 %v611, %v623
          %v625 = vmul.f32 %v613, 3.8918573e-05
          %v626 = vadd.f32 %v625, 0.001143296
          %v627 = vmul.f32 %v613, %v626
          %v628 = vadd.f32 %v627, 0.014752088
          %v629 = vmul.f32 %v613, %v628
          %v630 = vadd.f32 %v629, 0.112945676
          %v631 = vmul.f32 %v613, %v630
          %v632 = vadd.f32 %v631, 0.4994258
          %v633 = vmul.f32 %v613, %v632
          %v634 = vadd.f32 %v633, 1.0
          %v635 = vrcp.pop %v634
          %v636 = vmul.f32 %v634, %v635
          %v637 = vsub.f32 1.0, %v636
          %v638 = vmul.f32 %v635, %v637
          %v639 = vadd.f32 %v635, %v638
          %vm640 = vweird.f32 %v634
          %vm641 = vweird.f32 %v635
          %vm642 = vmor %vm640, %vm641
          %v643 = vsel %vm642, %v635, %v639
          %v644 = vand.u32 2147483647, %v634
          %vm645 = vcmp.eq.f32.partialorder %v644, 8.507059e+37
          %v646 = vand.u32 %v634, 2147483648
          %v647 = vor.u32 1.1754944e-38, %v646
          %v648 = vsel %vm645, %v647, %v643
          %v649 = vmul.f32 %v624, %v648
          %v650 = vmin.f32 %v649, 1.0
          %v651 = vmax.f32 %v650, -1.0
          %v652 = vadd.f32 %v651, 1.0
          %v653 = vmul.f32 %v610, %v652
          %v654 = vsel %vm421, %v653, 0.0
          %655 = vadd.xlane.f32.xlu0 %v654
          %v656 = vpop.xlane.xlu0 %655
          %v657 = vrcp.pop 32.0
          %v658 = vmul.f32 32.0, %v657
          %v659 = vsub.f32 1.0, %v658
          %v660 = vmul.f32 %v657, %v659
          %v661 = vadd.f32 %v657, %v660
          %vm662 = vweird.f32 %v657
          %v663 = vsel %vm662, %v657, %v661
          %v664 = vmul.f32 %v656, %v663
          %v665 = vsub.f32 %v653, %v664
          %v666 = vmul.f32 %v665, %v665
          %v667 = vsel %vm421, %v666, 0.0
          %668 = vadd.xlane.f32.xlu0 %v667
          %v669 = vpop.xlane.xlu0 %668
          %v670 = vmul.f32 %v669, %v663
          %v671 = vadd.f32 %v670, 1e-05
          %v672 = vrsqrt.pop %v671
          %v673 = vmul.f32 %v672, %v671
          %v674 = vmul.f32 %v673, %v672
          %v675 = vmul.f32 0.5, %v674
          %v676 = vsub.f32 1.5, %v675
          %v677 = vmul.f32 %v672, %v676
          %vm678 = vweird.f32 %v671
          %vm679 = vweird.f32 %v672
          %vm680 = vmor %vm678, %vm679
          %v681 = vsel %vm680, %v672, %v677
          %v682 = vmul.f32 %v665, %v681
          %v683 = vld [vmem:[#allocation8] sm:$0x1]
          %v685 = vperm.slane %v683, 0
          %v687 = vmul.f32 %v682, %v685
          %v688 = vld [vmem:[#allocation9] sm:$0x1]
          %v690 = vperm.slane %v688, 0
          %v692 = vadd.f32 %v687, %v690
          %693 = vst.msk [vmem:[#allocation2] sm:$0xff] %vm421, %v692
        $region72: #{tpu_custom_call.1} parent=47 // pred_fallthru
          _
        %v694 = vld [vmem:[#allocation2] sm:$0xff]
        %v695 = vld [vmem:[%s365] sm:$0xff]
        %v696 = vld [vmem:[%s365 + $0x8] sm:$0xff]
        %v697 = vld [vmem:[%s365 + $0x10] sm:$0xff]
        %v698 = vld [vmem:[%s365 + $0x18] sm:$0xff]
        %v699 = vld [vmem:[%s407] sm:$0x1]
        %v701 = vperm.slane %v699, 0
        %vm703 = vcmask 261120
        %v705 = vsel %vm703, %v694, 0
        %707 = vmatpush.msra.mxu0 0.0
        %708 = vmatpush.msra.mxu0 0.0
        %709 = vmatpush.msra.mxu0 0.0
        %710 = vmatpush.msra.mxu0 0.0
        %711 = vmatpush.msra.mxu0 0.0
        %712 = vmatpush.msra.mxu0 0.0
        %713 = vmatpush.msra.mxu0 0.0
        %714 = vmatpush.msra.mxu0 0.0
        %715 = vmatpush.msra.mxu0 0.0
        %716 = vmatpush.msra.mxu0 0.0
        %717 = vmatpush.msra.mxu0 0.0
        %718 = vmatpush.msra.mxu0 0.0
        %v719 = vand.u32 %v698, 4294901760
        %720 = vmatpush.msra.mxu0 %v719
        %v721 = vand.u32 %v697, 4294901760
        %722 = vmatpush.msra.mxu0 %v721
        %v723 = vand.u32 %v696, 4294901760
        %724 = vmatpush.msra.mxu0 %v723
        %v725 = vand.u32 %v695, 4294901760
        %726 = vmatpush.msra.mxu0 %v725
        %v727 = vand.u32 %v705, 4294901760
        %v728 = vsub.f32 %v705, %v727
        %v729 = vand.u32 %v728, 4294901760
        %v730 = vsub.f32 %v728, %v729
        %v731 = vand.u32 %v730, 4294901760
        %732 = vmatmul.f32.gmra.mxu0 %v731
        %v733 = vpop.f32.mrf.mxu0
        %v734 = vadd.f32 %v701, %v733
        %735 = vdwg.mxu0
        %736 = vmatpush.msra.mxu0 0.0
        %737 = vmatpush.msra.mxu0 0.0
        %738 = vmatpush.msra.mxu0 0.0
        %739 = vmatpush.msra.mxu0 0.0
        %740 = vmatpush.msra.mxu0 0.0
        %741 = vmatpush.msra.mxu0 0.0
        %742 = vmatpush.msra.mxu0 0.0
        %743 = vmatpush.msra.mxu0 0.0
        %744 = vmatpush.msra.mxu0 0.0
        %745 = vmatpush.msra.mxu0 0.0
        %746 = vmatpush.msra.mxu0 0.0
        %747 = vmatpush.msra.mxu0 0.0
        %v748 = vand.u32 %v698, 4294901760
        %v749 = vsub.f32 %v698, %v748
        %v750 = vand.u32 %v749, 4294901760
        %v751 = vsub.f32 %v749, %v750
        %v752 = vand.u32 %v751, 4294901760
        %753 = vmatpush.msra.mxu0 %v752
        %v754 = vand.u32 %v697, 4294901760
        %v755 = vsub.f32 %v697, %v754
        %v756 = vand.u32 %v755, 4294901760
        %v757 = vsub.f32 %v755, %v756
        %v758 = vand.u32 %v757, 4294901760
        %759 = vmatpush.msra.mxu0 %v758
        %v760 = vand.u32 %v696, 4294901760
        %v761 = vsub.f32 %v696, %v760
        %v762 = vand.u32 %v761, 4294901760
        %v763 = vsub.f32 %v761, %v762
        %v764 = vand.u32 %v763, 4294901760
        %765 = vmatpush.msra.mxu0 %v764
        %v766 = vand.u32 %v695, 4294901760
        %v767 = vsub.f32 %v695, %v766
        %v768 = vand.u32 %v767, 4294901760
        %v769 = vsub.f32 %v767, %v768
        %v770 = vand.u32 %v769, 4294901760
        %771 = vmatpush.msra.mxu0 %v770
        %v772 = vand.u32 %v705, 4294901760
        %773 = vmatmul.f32.gmra.mxu0 %v772
        %v774 = vpop.f32.mrf.mxu0
        %v775 = vadd.f32 %v734, %v774
        %776 = vdwg.mxu0
        %777 = vmatpush.msra.mxu0 0.0
        %778 = vmatpush.msra.mxu0 0.0
        %779 = vmatpush.msra.mxu0 0.0
        %780 = vmatpush.msra.mxu0 0.0
        %781 = vmatpush.msra.mxu0 0.0
        %782 = vmatpush.msra.mxu0 0.0
        %783 = vmatpush.msra.mxu0 0.0
        %784 = vmatpush.msra.mxu0 0.0
        %785 = vmatpush.msra.mxu0 0.0
        %786 = vmatpush.msra.mxu0 0.0
        %787 = vmatpush.msra.mxu0 0.0
        %788 = vmatpush.msra.mxu0 0.0
        %v789 = vand.u32 %v698, 4294901760
        %v790 = vsub.f32 %v698, %v789
        %791 = vmatpush.msra.mxu0 %v790
        %v792 = vand.u32 %v697, 4294901760
        %v793 = vsub.f32 %v697, %v792
        %794 = vmatpush.msra.mxu0 %v793
        %v795 = vand.u32 %v696, 4294901760
        %v796 = vsub.f32 %v696, %v795
        %797 = vmatpush.msra.mxu0 %v796
        %v798 = vand.u32 %v695, 4294901760
        %v799 = vsub.f32 %v695, %v798
        %800 = vmatpush.msra.mxu0 %v799
        %v801 = vand.u32 %v705, 4294901760
        %v802 = vsub.f32 %v705, %v801
        %803 = vmatmul.f32.gmra.mxu0 %v802
        %v804 = vpop.f32.mrf.mxu0
        %v805 = vadd.f32 %v775, %v804
        %806 = vdwg.mxu0
        %807 = vmatpush.msra.mxu0 0.0
        %808 = vmatpush.msra.mxu0 0.0
        %809 = vmatpush.msra.mxu0 0.0
        %810 = vmatpush.msra.mxu0 0.0
        %811 = vmatpush.msra.mxu0 0.0
        %812 = vmatpush.msra.mxu0 0.0
        %813 = vmatpush.msra.mxu0 0.0
        %814 = vmatpush.msra.mxu0 0.0
        %815 = vmatpush.msra.mxu0 0.0
        %816 = vmatpush.msra.mxu0 0.0
        %817 = vmatpush.msra.mxu0 0.0
        %818 = vmatpush.msra.mxu0 0.0
        %v819 = vand.u32 %v698, 4294901760
        %820 = vmatpush.msra.mxu0 %v819
        %v821 = vand.u32 %v697, 4294901760
        %822 = vmatpush.msra.mxu0 %v821
        %v823 = vand.u32 %v696, 4294901760
        %824 = vmatpush.msra.mxu0 %v823
        %v825 = vand.u32 %v695, 4294901760
        %826 = vmatpush.msra.mxu0 %v825
        %v827 = vand.u32 %v705, 4294901760
        %v828 = vsub.f32 %v705, %v827
        %v829 = vand.u32 %v828, 4294901760
        %830 = vmatmul.f32.gmra.mxu0 %v829
        %v831 = vpop.f32.mrf.mxu0
        %v832 = vadd.f32 %v805, %v831
        %833 = vdwg.mxu0
        %834 = vmatpush.msra.mxu0 0.0
        %835 = vmatpush.msra.mxu0 0.0
        %836 = vmatpush.msra.mxu0 0.0
        %837 = vmatpush.msra.mxu0 0.0
        %838 = vmatpush.msra.mxu0 0.0
        %839 = vmatpush.msra.mxu0 0.0
        %840 = vmatpush.msra.mxu0 0.0
        %841 = vmatpush.msra.mxu0 0.0
        %842 = vmatpush.msra.mxu0 0.0
        %843 = vmatpush.msra.mxu0 0.0
        %844 = vmatpush.msra.mxu0 0.0
        %845 = vmatpush.msra.mxu0 0.0
        %v846 = vand.u32 %v698, 4294901760
        %v847 = vsub.f32 %v698, %v846
        %v848 = vand.u32 %v847, 4294901760
        %849 = vmatpush.msra.mxu0 %v848
        %v850 = vand.u32 %v697, 4294901760
        %v851 = vsub.f32 %v697, %v850
        %v852 = vand.u32 %v851, 4294901760
        %853 = vmatpush.msra.mxu0 %v852
        %v854 = vand.u32 %v696, 4294901760
        %v855 = vsub.f32 %v696, %v854
        %v856 = vand.u32 %v855, 4294901760
        %857 = vmatpush.msra.mxu0 %v856
        %v858 = vand.u32 %v695, 4294901760
        %v859 = vsub.f32 %v695, %v858
        %v860 = vand.u32 %v859, 4294901760
        %861 = vmatpush.msra.mxu0 %v860
        %v862 = vand.u32 %v705, 4294901760
        %863 = vmatmul.f32.gmra.mxu0 %v862
        %v864 = vpop.f32.mrf.mxu0
        %v865 = vadd.f32 %v832, %v864
        %866 = vdwg.mxu0
        %867 = vmatpush.msra.mxu0 0.0
        %868 = vmatpush.msra.mxu0 0.0
        %869 = vmatpush.msra.mxu0 0.0
        %870 = vmatpush.msra.mxu0 0.0
        %871 = vmatpush.msra.mxu0 0.0
        %872 = vmatpush.msra.mxu0 0.0
        %873 = vmatpush.msra.mxu0 0.0
        %874 = vmatpush.msra.mxu0 0.0
        %875 = vmatpush.msra.mxu0 0.0
        %876 = vmatpush.msra.mxu0 0.0
        %877 = vmatpush.msra.mxu0 0.0
        %878 = vmatpush.msra.mxu0 0.0
        %v879 = vand.u32 %v698, 4294901760
        %880 = vmatpush.msra.mxu0 %v879
        %v881 = vand.u32 %v697, 4294901760
        %882 = vmatpush.msra.mxu0 %v881
        %v883 = vand.u32 %v696, 4294901760
        %884 = vmatpush.msra.mxu0 %v883
        %v885 = vand.u32 %v695, 4294901760
        %886 = vmatpush.msra.mxu0 %v885
        %v887 = vand.u32 %v705, 4294901760
        %888 = vmatmul.f32.gmra.mxu0 %v887
        %v889 = vpop.f32.mrf.mxu0
        %v890 = vadd.f32 %v865, %v889
        %891 = vdwg.mxu0
        %892 = vst [vmem:[%s404] sm:$0xff] %v890
        %s893 = sand.u32 %s210, 1
        %s894 = scalar_lea.sflag [#allocation5], %s893
        %s895 = sand.u32 %s210, 1
        %s896 = smul.addr %s895, 8
        %s897 = scalar_lea.vmem [#allocation12], %s896
        // Predicated region
        $region73: #{tpu_custom_call.1} parent=47 // pred_check
          %p898 = pneg %p220
        $region74: #{tpu_custom_call.1} parent=47 // pred_check_branch
          %900 = sbr.rel (%p898) target = $region76
        $region75: #{tpu_custom_call.1} parent=47 // pred_region
          %902 = vsyncadd %s894, 0
          %s903 = smul.addr %s30, 2
          %s904 = sadd.s32 %s31, %s903
          %s905 = smul.addr %s904, 8
          %s906 = scalar_lea.hbm %s7, %s905
          %s908 = sshll.u32 %s897, 4
          %s909 = int_to_ptr.vmem [resolvable:$true] %s908
          %s910 = sshll.u32 %s906, 4
          %s911 = int_to_ptr.hbm [resolvable:$true] %s910
          %913 = dma.vmem_to_hbm [thread:$0]  %s909, 128, %s911, %s894
        $region76: #{tpu_custom_call.1} parent=47 // pred_fallthru
          _
      $region48: #{tpu_custom_call.1} parent=5 // pred_fallthru
        _
      %p914 = scmp.le.s32.totalorder 2, %s21
      // Predicated region
      $region77: #{tpu_custom_call.1} parent=5 // pred_check
        %p915 = pneg %p914
      $region78: #{tpu_custom_call.1} parent=5 // pred_check_branch
        %917 = sbr.rel (%p915) target = $region80
      $region79: #{tpu_custom_call.1} parent=5 // pred_region
        %s918 = ssub.s32 %s21, 2
        // Predicated region
        $region81: #{tpu_custom_call.1} parent=79 // pred_check
          %p919 = pneg %p226
        $region82: #{tpu_custom_call.1} parent=79 // pred_check_branch
          %921 = sbr.rel (%p919) target = $region84
        $region83: #{tpu_custom_call.1} parent=79 // pred_region
          %s922 = sand.u32 %s211, 1
          %s923 = scalar_lea.sflag [#allocation5], %s922
          %s924 = sand.u32 %s211, 1
          %s925 = smul.addr %s924, 8
          %s926 = scalar_lea.vmem [#allocation12], %s925
          %928 = dma.done %s923, 128
        $region84: #{tpu_custom_call.1} parent=79 // pred_fallthru
          _
      $region80: #{tpu_custom_call.1} parent=5 // pred_fallthru
        _
    $region6: #{tpu_custom_call.1} parent=1 // loop_footer
      %s25 = sadd.s32 1, %s21
    $region7: #{tpu_custom_call.1} parent=1 // loop_footer_branch
      %20 = sbr.rel target = $region3
    $region8: #{tpu_custom_call.1} parent=1 // loop_exit
      _
    %929 = vsyncpa [#allocation4], 1
    %s930 = scalar_lea.sflag [#allocation4], 1
    %931 = vsyncpa %s930, 1
    %932 = vsyncpa [#allocation7], 1
    %933 = vsyncpa [#allocation10], 1
    %934 = vsyncpa [#allocation5], 1
    %s935 = scalar_lea.sflag [#allocation5], 1
    %936 = vsyncpa %s935, 1

</llo_original>
